<compile_context>
chip_gen: v7x
topology: tpu7x:2x2x1
jax: 0.10.0
libtpu: 0.0.40
codegen_flags: <defaults>
</compile_context>

<pallas_src>
import itertools
import numpy as np
import jax
import jax.numpy as jnp
from jax import lax
from jax.experimental import pallas as pl
from jax.experimental.pallas import tpu as pltpu

KSZ = 3          # kernel_size
STRIDE = 2       # scale_factor
EPS = 1e-5       # BatchNorm eps

_SHIFTS = tuple(itertools.product((0, 1), repeat=3))   # input tap offsets (od,oh,ow)
_PHASES = tuple(itertools.product((0, 1), repeat=3))   # output parities   (pd,ph,pw)


def _round_up(a, b):
    return (a + b - 1) // b * b


def _vmem_limit_bytes():
    """Per-generation VMEM cap: leave >=16 MiB headroom, never above 112 MiB."""
    mib = 1024 * 1024
    try:
        cap = int(pltpu.get_tpu_info().vmem_capacity_bytes)
    except Exception:
        return 48 * mib                       # safe on all generations
    return int(min(max(cap - 16 * mib, cap // 2), 112 * mib))


def _tap_kernel_idx(parity, offset):
    """Polyphase decomposition of ConvTranspose(k=3, s=2, p=1, op=1) per dim:
       even output o=2t:   y += x[t] * w[1]
       odd  output o=2t+1: y += x[t] * w[2] + x[t+1] * w[0]
    Returns the ConvTranspose kernel index for (parity, tap offset) or None."""
    if parity == 0:
        return 1 if offset == 0 else None
    return 2 if offset == 0 else 0


def _shift_tap(xc, od, oh, ow):
    """tap[..., d, h, w] = x[..., d+od, h+oh, w+ow] (zero outside)."""
    if od:
        xc = jnp.pad(xc[:, :, 1:], ((0, 0), (0, 0), (0, 1), (0, 0), (0, 0)))
    if oh:
        xc = jnp.pad(xc[:, :, :, 1:], ((0, 0), (0, 0), (0, 0), (0, 1), (0, 0)))
    if ow:
        xc = jnp.pad(xc[:, :, :, :, 1:], ((0, 0), (0, 0), (0, 0), (0, 0), (0, 1)))
    return xc


# ----------------------------- Pallas kernels ------------------------------

def _conv_stats_kernel(w_ref, cols_ref, y_ref, sum_ref, ssq_ref):
    """(8*C8,Kp)@(Kp,ts) bf16 MXU matmul (f32 acc) producing all 8 output
    parities at once, plus in-kernel lane-reduced channel sum / sumsq."""
    s = pl.program_id(1)

    @pl.when(s == 0)
    def _():
        sum_ref[...] = jnp.zeros_like(sum_ref)
        ssq_ref[...] = jnp.zeros_like(ssq_ref)

    y = jnp.dot(w_ref[...], cols_ref[0], preferred_element_type=jnp.float32)
    y_ref[0] = y.astype(y_ref.dtype)                     # bf16 intermediate
    # Cross-lane reduces run on the XLU -- an idle slot in this HBM-bound kernel.
    sum_ref[0] += jnp.sum(y, axis=-1, keepdims=True)
    ssq_ref[0] += jnp.sum(y * y, axis=-1, keepdims=True)


def _bn_relu_kernel(y_ref, scale_ref, bias_ref, o_ref):
    """Folded BatchNorm (y*scale + bias) + ReLU; bf16 in, f32 math, f32 out."""
    y = y_ref[0].astype(jnp.float32)                     # (8*C8, ts)
    o_ref[0] = jnp.maximum(y * scale_ref[...] + bias_ref[...], 0.0)


# ------------------------------- wrapper -----------------------------------

def upsample3d_unit(x, w_t, gamma, beta, *, tile_s=512):
    """x: (N, Cin, D, H, W) f32;  w_t: (Cin, Cout, 3, 3, 3) ConvTranspose3d weight.
    Returns ReLU(BatchNorm3d(ConvTranspose3d(x))) with shape (N, Cout, 2D, 2H, 2W).
    tile_s: spatial lane-tile; sweep 512-2048 on v5e/v6e, keep ~512-1024 on v7x."""
    N, Cin, D, H, W = x.shape
    Cout = w_t.shape[1]
    S = D * H * W
    C8 = _round_up(Cout, 8)
    W8 = 8 * C8                      # 8 output-parity phases stacked on the M dim
    K_all = 8 * Cin                  # 8 shifted copies of x, channel-minor
    Kp = _round_up(K_all, 16)        # bf16 sublane pack

    # ts: 128-multiple that divides Sp so the post-kernel :S slice is a no-op
    # whenever S is already 128-aligned.
    Sp = _round_up(S, 128)
    ts_cap = max(128, min(_round_up(tile_s, 128), Sp))
    ts = 128
    for cand in range(ts_cap, 0, -128):
        if Sp % cand == 0:
            ts = cand
            break

    vmem_limit = _vmem_limit_bytes()

    # --- shared tap tensor: 8 shifted copies of x (bf16, shift-major) --------
    # TODO(synk): build the taps in-VMEM from x itself (halo'd BlockSpec or
    #             pl.ANY + manual DMA + pltpu.roll/masks) to remove the
    #             remaining 8x input-side HBM inflation of this cols tensor.
    x_bf = x.astype(jnp.bfloat16)
    taps = [_shift_tap(x_bf, od, oh, ow) for (od, oh, ow) in _SHIFTS]
    cols = jnp.stack(taps, axis=1).reshape(N, K_all, S)
    cols = jnp.pad(cols, ((0, 0), (0, Kp - K_all), (0, Sp - S)))   # (N, Kp, Sp)

    # --- stacked polyphase weights: (8*C8, Kp) bf16, zeros in unused rows ----
    w_f = w_t.astype(jnp.float32)                                  # (Cin, Cout, 3,3,3)
    phase_rows = []
    for (pd, ph_, pw) in _PHASES:
        blocks = []
        for (od, oh, ow) in _SHIFTS:
            kd = _tap_kernel_idx(pd, od)
            kh = _tap_kernel_idx(ph_, oh)
            kw = _tap_kernel_idx(pw, ow)
            if kd is None or kh is None or kw is None:
                blocks.append(jnp.zeros((Cout, Cin), jnp.float32))
            else:
                blocks.append(w_f[:, :, kd, kh, kw].T)             # (Cout, Cin)
        wp = jnp.concatenate(blocks, axis=1)                       # (Cout, K_all)
        phase_rows.append(jnp.pad(wp, ((0, C8 - Cout), (0, Kp - K_all))))
    w_all = jnp.concatenate(phase_rows, axis=0).astype(jnp.bfloat16)   # (W8, Kp)

    # --- kernel 1: all-phase polyphase conv + in-kernel channel stats --------
    y_all, sum_p, ssq_p = pl.pallas_call(
        _conv_stats_kernel,
        out_shape=(jax.ShapeDtypeStruct((N, W8, Sp), jnp.bfloat16),
                   jax.ShapeDtypeStruct((N, W8, 1), jnp.float32),
                   jax.ShapeDtypeStruct((N, W8, 1), jnp.float32)),
        grid=(N, Sp // ts),
        in_specs=[pl.BlockSpec((W8, Kp), lambda n, s: (0, 0)),
                  pl.BlockSpec((1, Kp, ts), lambda n, s: (n, 0, s))],
        out_specs=(pl.BlockSpec((1, W8, ts), lambda n, s: (n, 0, s)),
                   pl.BlockSpec((1, W8, 1), lambda n, s: (n, 0, 0)),
                   pl.BlockSpec((1, W8, 1), lambda n, s: (n, 0, 0))),
        compiler_params=pltpu.CompilerParams(
            dimension_semantics=("parallel", "arbitrary"),   # N splits v7x's 2 TCs
            vmem_limit_bytes=vmem_limit),
    )(w_all, cols)

    # --- BatchNorm (training-mode batch stats), folded into scale/bias -------
    # Padded lanes / channel rows / K rows contribute exact zeros (zero
    # weights, zero cols, bias-free conv), so the unpadded count stays valid.
    count = jnp.float32(N * S * 8)                           # N * Do * Ho * Wo
    sum_c = jnp.sum(sum_p.reshape(N, 8, C8), axis=(0, 1))
    ssq_c = jnp.sum(ssq_p.reshape(N, 8, C8), axis=(0, 1))
    mean = sum_c / count
    # TODO(synk): E[y^2]-mean^2 cancels badly for |mean| >> std; a shifted /
    #             Welford-style accumulation would be more robust.
    var = jnp.maximum(ssq_c / count - mean * mean, 0.0)
    inv_std = lax.rsqrt(var + EPS)
    gamma8 = jnp.pad(gamma.astype(jnp.float32), (0, C8 - Cout))
    beta8 = jnp.pad(beta.astype(jnp.float32), (0, C8 - Cout))
    scale_c = gamma8 * inv_std
    bias_c = beta8 - mean * scale_c
    scale = jnp.tile(scale_c, 8).reshape(W8, 1)              # per (phase, channel) row
    bias = jnp.tile(bias_c, 8).reshape(W8, 1)

    # --- kernel 2: fused scale/bias + ReLU over the merged phase axis --------
    # (No input_output_aliases: y is bf16 while the module output stays f32.)
    o_all = pl.pallas_call(
        _bn_relu_kernel,
        out_shape=jax.ShapeDtypeStruct((N, W8, Sp), jnp.float32),
        grid=(N, Sp // ts),
        in_specs=[pl.BlockSpec((1, W8, ts), lambda n, s: (n, 0, s)),
                  pl.BlockSpec((W8, 1), lambda n, s: (0, 0)),
                  pl.BlockSpec((W8, 1), lambda n, s: (0, 0))],
        out_specs=pl.BlockSpec((1, W8, ts), lambda n, s: (n, 0, s)),
        compiler_params=pltpu.CompilerParams(
            dimension_semantics=("parallel", "parallel"),
            vmem_limit_bytes=vmem_limit),
    )(y_all, scale, bias)

    # --- interleave the 8 parity slabs -> NCDHW (single XLA pass) ------------
    # TODO(synk): fold the W-parity interleave into kernel 2 (XLU roll /
    #             strided store) so this pass only permutes whole lane rows.
    o = o_all.reshape(N, 8, C8, Sp)[:, :, :Cout, :S]          # no-op slices when aligned
    o = o.reshape(N, 2, 2, 2, Cout, D, H, W)                  # (N,pd,ph,pw,C,D,H,W)
    out = o.transpose(0, 4, 5, 1, 6, 2, 7, 3)                 # (N,C,D,pd,H,ph,W,pw)
    return out.reshape(N, Cout, STRIDE * D, STRIDE * H, STRIDE * W)


# --------------------------- pure-JAX reference -----------------------------

def reference(x, w_t, gamma, beta):
    w_conv = jnp.flip(w_t, axis=(2, 3, 4)).transpose(1, 0, 2, 3, 4)  # (Cout,Cin,3,3,3)
    y = lax.conv_general_dilated(
        x, w_conv, window_strides=(1, 1, 1),
        padding=[(1, 2), (1, 2), (1, 2)],
        lhs_dilation=(STRIDE, STRIDE, STRIDE),
        dimension_numbers=("NCDHW", "OIDHW", "NCDHW"),
        precision=lax.Precision.HIGHEST)
    mean = jnp.mean(y, axis=(0, 2, 3, 4), keepdims=True)
    var = jnp.mean((y - mean) ** 2, axis=(0, 2, 3, 4), keepdims=True)
    g = gamma.reshape(1, -1, 1, 1, 1)
    b = beta.reshape(1, -1, 1, 1, 1)
    return jnp.maximum((y - mean) * lax.rsqrt(var + EPS) * g + b, 0.0)


# --------------------------------- main -------------------------------------

if __name__ == "__main__":
    N, Cin, Cout, D, H, W = 2, 4, 8, 8, 8, 8

    key = jax.random.PRNGKey(0)
    kx, kw, kg, kb = jax.random.split(key, 4)
    x = jax.random.normal(kx, (N, Cin, D, H, W), dtype=jnp.float32)
    # ConvTranspose3d weight shape: (in_channels, out_channels, kD, kH, kW)
    w_t = 0.1 * jax.random.normal(kw, (Cin, Cout, KSZ, KSZ, KSZ), dtype=jnp.float32)
    gamma = 1.0 + 0.1 * jax.random.normal(kg, (Cout,), dtype=jnp.float32)
    beta = 0.1 * jax.random.normal(kb, (Cout,), dtype=jnp.float32)

    out = jax.block_until_ready(jax.jit(upsample3d_unit)(x, w_t, gamma, beta))
    ref = jax.block_until_ready(reference(x, w_t, gamma, beta))

    assert out.shape == (N, Cout, D * STRIDE, H * STRIDE, W * STRIDE), out.shape
    # bf16 matmul operands + bf16 y intermediate (f32 accumulation/stats) vs
    # f32 HIGHEST reference -> looser tolerance.
    np.testing.assert_allclose(np.asarray(out), np.asarray(ref), rtol=2e-2, atol=2e-2)
    print("KERNEL_OK")
</pallas_src>

<mosaic_0001>
module attributes {stable_mosaic.version = 11 : i64} {
  func.func @_conv_stats_kernel(%arg0: i32, %arg1: i32, %arg2: memref<64x32xbf16, #tpu.memory_space<vmem>>, %arg3: memref<1x32x512xbf16, #tpu.memory_space<vmem>>, %arg4: memref<1x64x512xbf16, #tpu.memory_space<vmem>>, %arg5: memref<1x64x1xf32, #tpu.memory_space<vmem>>, %arg6: memref<1x64x1xf32, #tpu.memory_space<vmem>>) attributes {dimension_semantics = [#tpu.dimension_semantics<parallel>, #tpu.dimension_semantics<arbitrary>], iteration_bounds = array<i64: 2, 1>, scalar_prefetch = 0 : i64, scratch_operands = 0 : i64, tpu.core_type = #tpu.core_type<tc>, window_params = [{pipeline_mode = #tpu.pipeline_mode<synchronous>, transform_indices = @transform_0, window_bounds = array<i64: 64, 32>}, {transform_indices = @transform_1, window_bounds = array<i64: 1, 32, 512>}, {transform_indices = @transform_2, window_bounds = array<i64: 1, 64, 512>}, {transform_indices = @transform_3, window_bounds = array<i64: 1, 64, 1>}, {transform_indices = @transform_4, window_bounds = array<i64: 1, 64, 1>}]} {
    %c0_i32 = arith.constant 0 : i32
    %0 = arith.cmpi eq, %arg1, %c0_i32 : i32
    %1 = arith.extui %0 : i1 to i32
    %c0_i32_0 = arith.constant 0 : i32
    %2 = arith.cmpi ne, %1, %c0_i32_0 : i32
    scf.if %2 {
      %cst_22 = arith.constant 0.000000e+00 : f32
      %28 = vector.broadcast %cst_22 : f32 to vector<1x64x1xf32>
      %c0_23 = arith.constant 0 : index
      %c0_24 = arith.constant 0 : index
      %c0_25 = arith.constant 0 : index
      %29 = vector.load %arg5[%c0_23, %c0_24, %c0_25] : memref<1x64x1xf32, #tpu.memory_space<vmem>>, vector<1x64x1xf32>
      tpu.vector_store %arg5[%c0_23, %c0_24, %c0_25], %28 {strides = array<i32>} : memref<1x64x1xf32, #tpu.memory_space<vmem>>, vector<1x64x1xf32>,
      %cst_26 = arith.constant 0.000000e+00 : f32
      %30 = vector.broadcast %cst_26 : f32 to vector<1x64x1xf32>
      %c0_27 = arith.constant 0 : index
      %c0_28 = arith.constant 0 : index
      %c0_29 = arith.constant 0 : index
      %31 = vector.load %arg6[%c0_27, %c0_28, %c0_29] : memref<1x64x1xf32, #tpu.memory_space<vmem>>, vector<1x64x1xf32>
      tpu.vector_store %arg6[%c0_27, %c0_28, %c0_29], %30 {strides = array<i32>} : memref<1x64x1xf32, #tpu.memory_space<vmem>>, vector<1x64x1xf32>,
    } else {
    }
    %c0 = arith.constant 0 : index
    %c0_1 = arith.constant 0 : index
    %3 = vector.load %arg2[%c0, %c0_1] : memref<64x32xbf16, #tpu.memory_space<vmem>>, vector<64x32xbf16>
    %c0_2 = arith.constant 0 : index
    %c0_3 = arith.constant 0 : index
    %c0_4 = arith.constant 0 : index
    %4 = vector.load %arg3[%c0_2, %c0_3, %c0_4] : memref<1x32x512xbf16, #tpu.memory_space<vmem>>, vector<1x32x512xbf16>
    %5 = vector.shape_cast %4 : vector<1x32x512xbf16> to vector<32x512xbf16>
    %cst = arith.constant dense<0.000000e+00> : vector<64x512xf32>
    %6 = tpu.matmul %3, %5, %cst {dimension_numbers = #tpu.dot_dimension_numbers<[1], [0], [0], [1], [0, 0, 1, 1], [], []>} : vector<64x32xbf16>, vector<32x512xbf16>, vector<64x512xf32> -> vector<64x512xf32>
    %7 = arith.truncf %6 : vector<64x512xf32> to vector<64x512xbf16>
    %c0_5 = arith.constant 0 : index
    %c0_6 = arith.constant 0 : index
    %c0_7 = arith.constant 0 : index
    %8 = vector.load %arg4[%c0_5, %c0_6, %c0_7] : memref<1x64x512xbf16, #tpu.memory_space<vmem>>, vector<1x64x512xbf16>
    %9 = vector.shape_cast %8 : vector<1x64x512xbf16> to vector<64x512xbf16>
    %10 = vector.shape_cast %7 : vector<64x512xbf16> to vector<1x64x512xbf16>
    tpu.vector_store %arg4[%c0_5, %c0_6, %c0_7], %10 {strides = array<i32>} : memref<1x64x512xbf16, #tpu.memory_space<vmem>>, vector<1x64x512xbf16>,
    %c0_8 = arith.constant 0 : index
    %c0_9 = arith.constant 0 : index
    %c0_10 = arith.constant 0 : index
    %11 = vector.load %arg5[%c0_8, %c0_9, %c0_10] : memref<1x64x1xf32, #tpu.memory_space<vmem>>, vector<1x64x1xf32>
    %12 = vector.shape_cast %11 : vector<1x64x1xf32> to vector<64x1xf32>
    %cst_11 = arith.constant dense<0.000000e+00> : vector<64xf32>
    %13 = vector.multi_reduction <add>, %6, %cst_11 [1] : vector<64x512xf32> to vector<64xf32>
    %14 = vector.shape_cast %13 : vector<64xf32> to vector<64x1xf32>
    %15 = arith.addf %12, %14 : vector<64x1xf32>
    %c0_12 = arith.constant 0 : index
    %c0_13 = arith.constant 0 : index
    %c0_14 = arith.constant 0 : index
    %16 = vector.load %arg5[%c0_12, %c0_13, %c0_14] : memref<1x64x1xf32, #tpu.memory_space<vmem>>, vector<1x64x1xf32>
    %17 = vector.shape_cast %16 : vector<1x64x1xf32> to vector<64x1xf32>
    %18 = vector.shape_cast %15 : vector<64x1xf32> to vector<1x64x1xf32>
    tpu.vector_store %arg5[%c0_12, %c0_13, %c0_14], %18 {strides = array<i32>} : memref<1x64x1xf32, #tpu.memory_space<vmem>>, vector<1x64x1xf32>,
    %c0_15 = arith.constant 0 : index
    %c0_16 = arith.constant 0 : index
    %c0_17 = arith.constant 0 : index
    %19 = vector.load %arg6[%c0_15, %c0_16, %c0_17] : memref<1x64x1xf32, #tpu.memory_space<vmem>>, vector<1x64x1xf32>
    %20 = vector.shape_cast %19 : vector<1x64x1xf32> to vector<64x1xf32>
    %21 = arith.mulf %6, %6 : vector<64x512xf32>
    %cst_18 = arith.constant dense<0.000000e+00> : vector<64xf32>
    %22 = vector.multi_reduction <add>, %21, %cst_18 [1] : vector<64x512xf32> to vector<64xf32>
    %23 = vector.shape_cast %22 : vector<64xf32> to vector<64x1xf32>
    %24 = arith.addf %20, %23 : vector<64x1xf32>
    %c0_19 = arith.constant 0 : index
    %c0_20 = arith.constant 0 : index
    %c0_21 = arith.constant 0 : index
    %25 = vector.load %arg6[%c0_19, %c0_20, %c0_21] : memref<1x64x1xf32, #tpu.memory_space<vmem>>, vector<1x64x1xf32>
    %26 = vector.shape_cast %25 : vector<1x64x1xf32> to vector<64x1xf32>
    %27 = vector.shape_cast %24 : vector<64x1xf32> to vector<1x64x1xf32>
    tpu.vector_store %arg6[%c0_19, %c0_20, %c0_21], %27 {strides = array<i32>} : memref<1x64x1xf32, #tpu.memory_space<vmem>>, vector<1x64x1xf32>,
    return
  }
  func.func @transform_0(%arg0: i32, %arg1: i32) -> (i32, i32) {
    %c0_i32 = arith.constant 0 : i32
    %c0_i32_0 = arith.constant 0 : i32
    %c0_i32_1 = arith.constant 0 : i32
    return %c0_i32, %c0_i32_0 : i32, i32
  }
  func.func @transform_1(%arg0: i32, %arg1: i32) -> (i32, i32, i32) {
    %c0_i32 = arith.constant 0 : i32
    %c0_i32_0 = arith.constant 0 : i32
    return %arg0, %c0_i32, %arg1 : i32, i32, i32
  }
  func.func @transform_2(%arg0: i32, %arg1: i32) -> (i32, i32, i32) {
    %c0_i32 = arith.constant 0 : i32
    %c0_i32_0 = arith.constant 0 : i32
    return %arg0, %c0_i32, %arg1 : i32, i32, i32
  }
  func.func @transform_3(%arg0: i32, %arg1: i32) -> (i32, i32, i32) {
    %c0_i32 = arith.constant 0 : i32
    %c0_i32_0 = arith.constant 0 : i32
    %c0_i32_1 = arith.constant 0 : i32
    return %arg0, %c0_i32, %c0_i32_0 : i32, i32, i32
  }
  func.func @transform_4(%arg0: i32, %arg1: i32) -> (i32, i32, i32) {
    %c0_i32 = arith.constant 0 : i32
    %c0_i32_0 = arith.constant 0 : i32
    %c0_i32_1 = arith.constant 0 : i32
    return %arg0, %c0_i32, %c0_i32_0 : i32, i32, i32
  }
}

module attributes {stable_mosaic.version = 11 : i64} {
  func.func @_bn_relu_kernel(%arg0: i32, %arg1: i32, %arg2: memref<1x64x512xbf16, #tpu.memory_space<vmem>>, %arg3: memref<64x1xf32, #tpu.memory_space<vmem>>, %arg4: memref<64x1xf32, #tpu.memory_space<vmem>>, %arg5: memref<1x64x512xf32, #tpu.memory_space<vmem>>) attributes {dimension_semantics = [#tpu.dimension_semantics<parallel>, #tpu.dimension_semantics<parallel>], iteration_bounds = array<i64: 2, 1>, scalar_prefetch = 0 : i64, scratch_operands = 0 : i64, tpu.core_type = #tpu.core_type<tc>, window_params = [{transform_indices = @transform_0, window_bounds = array<i64: 1, 64, 512>}, {pipeline_mode = #tpu.pipeline_mode<synchronous>, transform_indices = @transform_1, window_bounds = array<i64: 64, 1>}, {pipeline_mode = #tpu.pipeline_mode<synchronous>, transform_indices = @transform_2, window_bounds = array<i64: 64, 1>}, {transform_indices = @transform_3, window_bounds = array<i64: 1, 64, 512>}]} {
    %c0 = arith.constant 0 : index
    %c0_0 = arith.constant 0 : index
    %c0_1 = arith.constant 0 : index
    %0 = vector.load %arg2[%c0, %c0_0, %c0_1] : memref<1x64x512xbf16, #tpu.memory_space<vmem>>, vector<1x64x512xbf16>
    %1 = vector.shape_cast %0 : vector<1x64x512xbf16> to vector<64x512xbf16>
    %2 = arith.extf %1 : vector<64x512xbf16> to vector<64x512xf32>
    %c0_2 = arith.constant 0 : index
    %c0_3 = arith.constant 0 : index
    %3 = vector.load %arg3[%c0_2, %c0_3] : memref<64x1xf32, #tpu.memory_space<vmem>>, vector<64x1xf32>
    %4 = vector.broadcast %3 : vector<64x1xf32> to vector<64x512xf32>
    %5 = arith.mulf %2, %4 : vector<64x512xf32>
    %c0_4 = arith.constant 0 : index
    %c0_5 = arith.constant 0 : index
    %6 = vector.load %arg4[%c0_4, %c0_5] : memref<64x1xf32, #tpu.memory_space<vmem>>, vector<64x1xf32>
    %7 = vector.broadcast %6 : vector<64x1xf32> to vector<64x512xf32>
    %8 = arith.addf %5, %7 : vector<64x512xf32>
    %cst = arith.constant 0.000000e+00 : f32
    %9 = vector.broadcast %cst : f32 to vector<64x512xf32>
    %10 = arith.maximumf %8, %9 : vector<64x512xf32>
    %c0_6 = arith.constant 0 : index
    %c0_7 = arith.constant 0 : index
    %c0_8 = arith.constant 0 : index
    %11 = vector.load %arg5[%c0_6, %c0_7, %c0_8] : memref<1x64x512xf32, #tpu.memory_space<vmem>>, vector<1x64x512xf32>
    %12 = vector.shape_cast %11 : vector<1x64x512xf32> to vector<64x512xf32>
    %13 = vector.shape_cast %10 : vector<64x512xf32> to vector<1x64x512xf32>
    tpu.vector_store %arg5[%c0_6, %c0_7, %c0_8], %13 {strides = array<i32>} : memref<1x64x512xf32, #tpu.memory_space<vmem>>, vector<1x64x512xf32>,
    return
  }
  func.func @transform_0(%arg0: i32, %arg1: i32) -> (i32, i32, i32) {
    %c0_i32 = arith.constant 0 : i32
    %c0_i32_0 = arith.constant 0 : i32
    return %arg0, %c0_i32, %arg1 : i32, i32, i32
  }
  func.func @transform_1(%arg0: i32, %arg1: i32) -> (i32, i32) {
    %c0_i32 = arith.constant 0 : i32
    %c0_i32_0 = arith.constant 0 : i32
    %c0_i32_1 = arith.constant 0 : i32
    return %c0_i32, %c0_i32_0 : i32, i32
  }
  func.func @transform_2(%arg0: i32, %arg1: i32) -> (i32, i32) {
    %c0_i32 = arith.constant 0 : i32
    %c0_i32_0 = arith.constant 0 : i32
    %c0_i32_1 = arith.constant 0 : i32
    return %c0_i32, %c0_i32_0 : i32, i32
  }
  func.func @transform_3(%arg0: i32, %arg1: i32) -> (i32, i32, i32) {
    %c0_i32 = arith.constant 0 : i32
    %c0_i32_0 = arith.constant 0 : i32
    return %arg0, %c0_i32, %arg1 : i32, i32, i32
  }
}

</mosaic_0001>

<llo_original>
// kernel: tile.18
$region0: #{tile.18}
  #allocation0 [shape = 's32[1]{0}', space=sflag, size = 0x4, scoped, tag = 'scoped memory for tile.18']
  %s0 = inlined_call_operand.vmem [shape: f32[8], index: 0, kind: input, shape index: {}]
  %s1 = inlined_call_operand.vmem [shape: f32[8,8], index: 1, kind: output, shape index: {}]
  // Predicated region
  $region2: #{tile.18} parent=0 // pred_check
    _
  $region3: #{tile.18} parent=0 // pred_check_branch
    %3 = sbr.rel (0) target = $region5
  $region4: #{tile.18} parent=0 // pred_region
    _
  $region5: #{tile.18} parent=0 // pred_fallthru
    _
  %v4 = vld [vmem:[%s0] ss:$0 sm:$0xff]
  %5 = vst [vmem:[%s1] sm:$0xff] %v4

// kernel: tile.0
$region0: #{tile.0}
  %s0 = inlined_call_operand.vmem [shape: f32[8,8], index: 0, kind: input, shape index: {}]
  %s1 = inlined_call_operand.vmem [shape: f32[64,1], index: 1, kind: output, shape index: {}]
  %v2 = vld [vmem:[%s0] sm:$0xff]
  %vm3 = vcmask 7168
  %4 = vst.msk [vmem:[%s1] ss:$8 sm:$0xf] %vm3, %v2
  %5 = vst.msk [vmem:[%s1] ss:$8 sm:$0xf0] %vm3, %v2
  %v6 = vld [vmem:[%s0] sm:$0xff]
  %7 = vrot.lane.b32.xlu0 %v6, 127
  %v8 = vpop.permute.xlu0 %7
  %vm9 = vcmask 7168
  %s10 = scalar_lea.vmem %s1, 1
  %11 = vst.msk [vmem:[%s10] ss:$8 sm:$0xf] %vm9, %v8
  %s12 = scalar_lea.vmem %s1, 1
  %13 = vst.msk [vmem:[%s12] ss:$8 sm:$0xf0] %vm9, %v8
  %v14 = vld [vmem:[%s0] sm:$0xff]
  %15 = vrot.lane.b32.xlu0 %v14, 126
  %v16 = vpop.permute.xlu0 %15
  %vm17 = vcmask 7168
  %s18 = scalar_lea.vmem %s1, 2
  %19 = vst.msk [vmem:[%s18] ss:$8 sm:$0xf] %vm17, %v16
  %s20 = scalar_lea.vmem %s1, 2
  %21 = vst.msk [vmem:[%s20] ss:$8 sm:$0xf0] %vm17, %v16
  %v22 = vld [vmem:[%s0] sm:$0xff]
  %23 = vrot.lane.b32.xlu0 %v22, 125
  %v24 = vpop.permute.xlu0 %23
  %vm25 = vcmask 7168
  %s26 = scalar_lea.vmem %s1, 3
  %27 = vst.msk [vmem:[%s26] ss:$8 sm:$0xf] %vm25, %v24
  %s28 = scalar_lea.vmem %s1, 3
  %29 = vst.msk [vmem:[%s28] ss:$8 sm:$0xf0] %vm25, %v24
  %v30 = vld [vmem:[%s0] sm:$0xff]
  %31 = vrot.lane.b32.xlu0 %v30, 124
  %v32 = vpop.permute.xlu0 %31
  %vm33 = vcmask 7168
  %s34 = scalar_lea.vmem %s1, 4
  %35 = vst.msk [vmem:[%s34] ss:$8 sm:$0xf] %vm33, %v32
  %s36 = scalar_lea.vmem %s1, 4
  %37 = vst.msk [vmem:[%s36] ss:$8 sm:$0xf0] %vm33, %v32
  %v38 = vld [vmem:[%s0] sm:$0xff]
  %39 = vrot.lane.b32.xlu0 %v38, 123
  %v40 = vpop.permute.xlu0 %39
  %vm41 = vcmask 7168
  %s42 = scalar_lea.vmem %s1, 5
  %43 = vst.msk [vmem:[%s42] ss:$8 sm:$0xf] %vm41, %v40
  %s44 = scalar_lea.vmem %s1, 5
  %45 = vst.msk [vmem:[%s44] ss:$8 sm:$0xf0] %vm41, %v40
  %v46 = vld [vmem:[%s0] sm:$0xff]
  %47 = vrot.lane.b32.xlu0 %v46, 122
  %v48 = vpop.permute.xlu0 %47
  %vm49 = vcmask 7168
  %s50 = scalar_lea.vmem %s1, 6
  %51 = vst.msk [vmem:[%s50] ss:$8 sm:$0xf] %vm49, %v48
  %s52 = scalar_lea.vmem %s1, 6
  %53 = vst.msk [vmem:[%s52] ss:$8 sm:$0xf0] %vm49, %v48
  %v54 = vld [vmem:[%s0] sm:$0xff]
  %55 = vrot.lane.b32.xlu0 %v54, 121
  %v56 = vpop.permute.xlu0 %55
  %vm57 = vcmask 7168
  %s58 = scalar_lea.vmem %s1, 7
  %59 = vst.msk [vmem:[%s58] ss:$8 sm:$0xf] %vm57, %v56
  %s60 = scalar_lea.vmem %s1, 7
  %61 = vst.msk [vmem:[%s60] ss:$8 sm:$0xf0] %vm57, %v56

// kernel: upsample3d_unit.3
$region0: #{upsample3d_unit.3}
  #allocation0 [shape = 'u32[]', space=smem, size = 0x4, offset = 0x4, fixed_abs, tag = 'smem constant byte address 0x4 - core index']
  #allocation1 [shape = 'u32[144,128]{1,0:T(1,128)}', space=vmem, size = 0x12000, scoped, tag = 'internal scratch']
  %s0 = inlined_call_operand.vmem [shape: bf16[2,64,512], index: 0, kind: input, shape index: {}]
  %s1 = inlined_call_operand.vmem [shape: f32[64,1], index: 1, kind: input, shape index: {}]
  %s2 = inlined_call_operand.vmem [shape: f32[64,1], index: 2, kind: input, shape index: {}]
  %s3 = inlined_call_operand.vmem [shape: f32[2,64,512], index: 3, kind: output, shape index: {}]
  %s4 = sld [smem:[#allocation0]]
  $region45: #{upsample3d_unit.3} parent=0
    _
  %s6 = ssub.s32 1, %s4
  %s7 = scalar_select 0, %s6, %s4
  loop: start=0, step=1, limit=4
  $region2: #{upsample3d_unit.3} parent=0 // loop_pre_header
    _
  $region3: #{upsample3d_unit.3} parent=0 // loop_header
    %s9 = sphi 0, %s13
    %p10 = scmp.ge.s32.totalorder %s9, 4
    %s16 = sphi 0, %s28
    %s17 = sphi 0, %s24
    %s18 = sphi 0, %s16
    %s19 = sphi 0, %s17
    %s20 = sphi 0, %s18
    %s21 = sphi 0, %s19
    %s33 = sphi 0, %s35
    %s36 = sphi 0, %s33
    %s37 = sphi 0, %s36
    %s53 = sphi 0, %s37
    %s57 = sphi 0, %s57
    %s59 = sphi 0, %s57
    %s60 = sphi 0, %s59
    %s74 = sphi 0, %s60
    %s78 = sphi 0, %s78
    %s80 = sphi 0, %s78
    %s81 = sphi 0, %s80
    %s95 = sphi 0, %s81
    %s103 = sphi 0, %s105
    %s106 = sphi 0, %s103
    %s107 = sphi 0, %s106
    %s123 = sphi 0, %s107
  $region4: #{upsample3d_unit.3} parent=0 // loop_header_branch
    %12 = sbr.rel (%p10) target = $region8
  $region5: #{upsample3d_unit.3} parent=0 // loop_body
    %s14 = ssub.s32 %s9, 1
    %s15 = ssub.s32 %s9, 2
    %s22 = sadd.s32 1, %s17
    %p23 = scmp.ge.s32.totalorder %s22, 1
    %s24 = scalar_select %p23, 0, %s22
    %s25 = sadd.s32 1, %s16
    %s26 = scalar_select %p23, %s25, %s16
    %p27 = scmp.ge.s32.totalorder %s26, 2
    %s28 = scalar_select %p27, 0, %s26
    %s29 = ssub.s32 %s16, %s28
    %s30 = ssub.s32 %s17, %s24
    %s31 = sor.u32 %s29, %s30
    %p32 = scmp.eq.s32.totalorder %s31, 0
    %s34 = sadd.s32 %s33, 1
    %s35 = scalar_select %p32, %s33, %s34
    %p38 = pneg %p32
    %p39 = scmp.eq.s32.totalorder %s9, 1
    %p40 = por %p38, %p39
    %p41 = scmp.ne.s32.totalorder %s33, %s36
    %p42 = scmp.eq.s32.totalorder %s9, 0
    %p43 = por %p41, %p42
    %p44 = scmp.ne.s32.totalorder %s33, %s36
    %p45 = scmp.eq.s32.totalorder %s14, 1
    %p46 = por %p44, %p45
    %p47 = scmp.ne.s32.totalorder %s36, %s37
    %p48 = scmp.eq.s32.totalorder %s14, 0
    %p49 = por %p47, %p48
    %p50 = scmp.ne.s32.totalorder %s36, %s37
    %p51 = scmp.eq.s32.totalorder %s15, 1
    %p52 = por %p50, %p51
    %p54 = scmp.ne.s32.totalorder %s37, %s53
    %p55 = scmp.eq.s32.totalorder %s15, 0
    %p56 = por %p54, %p55
    %s58 = sadd.s32 %s57, 1
    %p61 = scmp.eq.s32.totalorder %s9, 1
    %p62 = scmp.ne.s32.totalorder %s57, %s59
    %p63 = scmp.eq.s32.totalorder %s9, 0
    %p64 = por %p62, %p63
    %p65 = scmp.ne.s32.totalorder %s57, %s59
    %p66 = scmp.eq.s32.totalorder %s14, 1
    %p67 = por %p65, %p66
    %p68 = scmp.ne.s32.totalorder %s59, %s60
    %p69 = scmp.eq.s32.totalorder %s14, 0
    %p70 = por %p68, %p69
    %p71 = scmp.ne.s32.totalorder %s59, %s60
    %p72 = scmp.eq.s32.totalorder %s15, 1
    %p73 = por %p71, %p72
    %p75 = scmp.ne.s32.totalorder %s60, %s74
    %p76 = scmp.eq.s32.totalorder %s15, 0
    %p77 = por %p75, %p76
    %s79 = sadd.s32 %s78, 1
    %p82 = scmp.eq.s32.totalorder %s9, 1
    %p83 = scmp.ne.s32.totalorder %s78, %s80
    %p84 = scmp.eq.s32.totalorder %s9, 0
    %p85 = por %p83, %p84
    %p86 = scmp.ne.s32.totalorder %s78, %s80
    %p87 = scmp.eq.s32.totalorder %s14, 1
    %p88 = por %p86, %p87
    %p89 = scmp.ne.s32.totalorder %s80, %s81
    %p90 = scmp.eq.s32.totalorder %s14, 0
    %p91 = por %p89, %p90
    %p92 = scmp.ne.s32.totalorder %s80, %s81
    %p93 = scmp.eq.s32.totalorder %s15, 1
    %p94 = por %p92, %p93
    %p96 = scmp.ne.s32.totalorder %s81, %s95
    %p97 = scmp.eq.s32.totalorder %s15, 0
    %p98 = por %p96, %p97
    %s99 = ssub.s32 %s16, %s28
    %s100 = ssub.s32 %s17, %s24
    %s101 = sor.u32 %s99, %s100
    %p102 = scmp.eq.s32.totalorder %s101, 0
    %s104 = sadd.s32 %s103, 1
    %s105 = scalar_select %p102, %s103, %s104
    %p108 = pneg %p102
    %p109 = scmp.eq.s32.totalorder %s9, 1
    %p110 = por %p108, %p109
    %p111 = scmp.ne.s32.totalorder %s103, %s106
    %p112 = scmp.eq.s32.totalorder %s9, 0
    %p113 = por %p111, %p112
    %p114 = scmp.ne.s32.totalorder %s103, %s106
    %p115 = scmp.eq.s32.totalorder %s14, 1
    %p116 = por %p114, %p115
    %p117 = scmp.ne.s32.totalorder %s106, %s107
    %p118 = scmp.eq.s32.totalorder %s14, 0
    %p119 = por %p117, %p118
    %p120 = scmp.ne.s32.totalorder %s106, %s107
    %p121 = scmp.eq.s32.totalorder %s15, 1
    %p122 = por %p120, %p121
    %p124 = scmp.ne.s32.totalorder %s107, %s123
    %p125 = scmp.eq.s32.totalorder %s15, 0
    %p126 = por %p124, %p125
    %p127 = scmp.le.s32.totalorder 1, %s9
    %p128 = scmp.lt.s32.totalorder %s9, 3
    %p129 = pnand %p127, %p128
    %p130 = pneg %p129
    // Predicated region
    $region9: #{upsample3d_unit.3} parent=5 // pred_check
      _
    $region10: #{upsample3d_unit.3} parent=5 // pred_check_branch
      %132 = sbr.rel (%p129) target = $region12
    $region11: #{upsample3d_unit.3} parent=5 // pred_region
      %s133 = ssub.s32 %s9, 1
      // Predicated region
      $region13: #{upsample3d_unit.3} parent=11 // pred_check
        %p134 = pneg %p70
      $region14: #{upsample3d_unit.3} parent=11 // pred_check_branch
        %136 = sbr.rel (%p134) target = $region16
      $region15: #{upsample3d_unit.3} parent=11 // pred_region
        _
      $region16: #{upsample3d_unit.3} parent=11 // pred_fallthru
        _
      // Predicated region
      $region17: #{upsample3d_unit.3} parent=11 // pred_check
        %p137 = pneg %p91
      $region18: #{upsample3d_unit.3} parent=11 // pred_check_branch
        %139 = sbr.rel (%p137) target = $region20
      $region19: #{upsample3d_unit.3} parent=11 // pred_region
        _
      $region20: #{upsample3d_unit.3} parent=11 // pred_fallthru
        _
    $region12: #{upsample3d_unit.3} parent=5 // pred_fallthru
      _
    %p140 = scmp.lt.s32.totalorder %s9, 2
    // Predicated region
    $region21: #{upsample3d_unit.3} parent=5 // pred_check
      %p141 = pneg %p140
    $region22: #{upsample3d_unit.3} parent=5 // pred_check_branch
      %143 = sbr.rel (%p141) target = $region24
    $region23: #{upsample3d_unit.3} parent=5 // pred_region
      // Predicated region
      $region25: #{upsample3d_unit.3} parent=23 // pred_check
        %p144 = pneg %p43
      $region26: #{upsample3d_unit.3} parent=23 // pred_check_branch
        %146 = sbr.rel (%p144) target = $region28
      $region27: #{upsample3d_unit.3} parent=23 // pred_region
        %s147 = smul.u32 4, %s17
        %p148 = scmp.lt.s32.totalorder %s16, 1
        %s149 = scalar_select %p148, %s16, 1
        %p150 = scmp.lt.s32.totalorder %s147, 3
        %s151 = scalar_select %p150, %s147, 3
        %s152 = smul.addr %s149, 32
        %s153 = sadd.s32 %s151, %s152
        %s154 = smul.addr %s153, 4
        %s155 = scalar_lea.vmem %s0, %s154
        %s156 = smul.u32 4, %s17
      $region28: #{upsample3d_unit.3} parent=23 // pred_fallthru
        _
    $region24: #{upsample3d_unit.3} parent=5 // pred_fallthru
      _
    %p157 = scmp.le.s32.totalorder 1, %s9
    %p158 = scmp.lt.s32.totalorder %s9, 3
    %p159 = pnand %p157, %p158
    %p160 = pneg %p159
    // Predicated region
    $region29: #{upsample3d_unit.3} parent=5 // pred_check
      _
    $region30: #{upsample3d_unit.3} parent=5 // pred_check_branch
      %162 = sbr.rel (%p159) target = $region32
    $region31: #{upsample3d_unit.3} parent=5 // pred_region
      %s163 = ssub.s32 %s9, 1
      %s164 = smul.u32 4, %s19
      %p165 = scmp.lt.s32.totalorder %s18, 1
      %s166 = scalar_select %p165, %s18, 1
      %p167 = scmp.lt.s32.totalorder %s164, 3
      %s168 = scalar_select %p167, %s164, 3
      %s169 = smul.addr %s166, 32
      %s170 = sadd.s32 %s168, %s169
      %s171 = smul.addr %s170, 4
      %s172 = scalar_lea.vmem %s0, %s171
      %p173 = pneg %p49
      %p174 = pneg %p46
      %p175 = pneg %p70
      %p176 = pneg %p67
      %p177 = pneg %p91
      %p178 = pneg %p88
      %p179 = pneg %p119
      %p180 = pneg %p116
      %s181 = smul.u32 4, %s19
      %p182 = scmp.lt.s32.totalorder %s18, 1
      %s183 = scalar_select %p182, %s18, 1
      %p184 = scmp.lt.s32.totalorder %s181, 3
      %s185 = scalar_select %p184, %s181, 3
      %s186 = smul.addr %s183, 32
      %s187 = sadd.s32 %s185, %s186
      %s188 = smul.addr %s187, 8
      %s189 = scalar_lea.vmem %s3, %s188
      %s190 = smul.u32 4, %s19
      %p191 = scmp.lt.s32.totalorder %s18, 1
      %s192 = scalar_select %p191, %s18, 1
      %p193 = scmp.lt.s32.totalorder %s190, 3
      %s194 = scalar_select %p193, %s190, 3
      %s195 = smul.addr %s192, 32
      %s196 = sadd.s32 %s194, %s195
      %s197 = smul.addr %s196, 4
      %s198 = scalar_lea.vmem %s0, %s197
      %s199 = smul.u32 4, %s19
      %s200 = smul.u32 4, %s19
      %p201 = scmp.lt.s32.totalorder %s18, 1
      %s202 = scalar_select %p201, %s18, 1
      %p203 = scmp.lt.s32.totalorder %s200, 3
      %s204 = scalar_select %p203, %s200, 3
      %s205 = smul.addr %s202, 32
      %s206 = sadd.s32 %s204, %s205
      %s207 = smul.addr %s206, 8
      %s208 = scalar_lea.vmem %s3, %s207
      %s209 = smul.u32 4, %s19
      %v210 = vld [vmem:[%s198] sm:$0xff]
      %v211 = vld [vmem:[%s198 + $0x8] sm:$0xff]
      %v212 = vld [vmem:[%s198 + $0x10] sm:$0xff]
      %v213 = vld [vmem:[%s198 + $0x18] sm:$0xff]
      %v214 = vld [vmem:[%s198 + $0x20] sm:$0xff]
      %v215 = vld [vmem:[%s198 + $0x28] sm:$0xff]
      %v216 = vld [vmem:[%s198 + $0x30] sm:$0xff]
      %v217 = vld [vmem:[%s198 + $0x38] sm:$0xff]
      %v218 = vld [vmem:[%s198 + $0x40] sm:$0xff]
      %v219 = vld [vmem:[%s198 + $0x48] sm:$0xff]
      %v220 = vld [vmem:[%s198 + $0x50] sm:$0xff]
      %v221 = vld [vmem:[%s198 + $0x58] sm:$0xff]
      %v222 = vld [vmem:[%s198 + $0x60] sm:$0xff]
      %v223 = vld [vmem:[%s198 + $0x68] sm:$0xff]
      %v224 = vld [vmem:[%s198 + $0x70] sm:$0xff]
      %v225 = vld [vmem:[%s198 + $0x78] sm:$0xff]
      %v226 = vunpack.c.l.bf16 %v210
      %v227 = vunpack.c.h.bf16 %v210
      %v228 = vunpack.c.l.bf16 %v211
      %v229 = vunpack.c.h.bf16 %v211
      %v230 = vunpack.c.l.bf16 %v212
      %v231 = vunpack.c.h.bf16 %v212
      %v232 = vunpack.c.l.bf16 %v213
      %v233 = vunpack.c.h.bf16 %v213
      %v234 = vunpack.c.l.bf16 %v214
      %v235 = vunpack.c.h.bf16 %v214
      %v236 = vunpack.c.l.bf16 %v215
      %v237 = vunpack.c.h.bf16 %v215
      %v238 = vunpack.c.l.bf16 %v216
      %v239 = vunpack.c.h.bf16 %v216
      %v240 = vunpack.c.l.bf16 %v217
      %v241 = vunpack.c.h.bf16 %v217
      %v242 = vunpack.c.l.bf16 %v218
      %v243 = vunpack.c.h.bf16 %v218
      %v244 = vunpack.c.l.bf16 %v219
      %v245 = vunpack.c.h.bf16 %v219
      %v246 = vunpack.c.l.bf16 %v220
      %v247 = vunpack.c.h.bf16 %v220
      %v248 = vunpack.c.l.bf16 %v221
      %v249 = vunpack.c.h.bf16 %v221
      %v250 = vunpack.c.l.bf16 %v222
      %v251 = vunpack.c.h.bf16 %v222
      %v252 = vunpack.c.l.bf16 %v223
      %v253 = vunpack.c.h.bf16 %v223
      %v254 = vunpack.c.l.bf16 %v224
      %v255 = vunpack.c.h.bf16 %v224
      %v256 = vunpack.c.l.bf16 %v225
      %v257 = vunpack.c.h.bf16 %v225
      %v258 = vld [vmem:[%s1] sm:$0xff]
      %v259 = vld [vmem:[%s1 + $0x8] sm:$0xff]
      %v260 = vld [vmem:[%s1 + $0x10] sm:$0xff]
      %v261 = vld [vmem:[%s1 + $0x18] sm:$0xff]
      %v262 = vld [vmem:[%s1 + $0x20] sm:$0xff]
      %v263 = vld [vmem:[%s1 + $0x28] sm:$0xff]
      %v264 = vld [vmem:[%s1 + $0x30] sm:$0xff]
      %v265 = vld [vmem:[%s1 + $0x38] sm:$0xff]
      %267 = vset.pattern.permute.xlu0 0
      %268 = vperm.xlu0 %267, %v258
      %v269 = vpop.permute.xlu0 %268
      %272 = vset.pattern.permute.xlu0 0
      %273 = vperm.xlu0 %272, %v259
      %v274 = vpop.permute.xlu0 %273
      %277 = vset.pattern.permute.xlu0 0
      %278 = vperm.xlu0 %277, %v260
      %v279 = vpop.permute.xlu0 %278
      %282 = vset.pattern.permute.xlu0 0
      %283 = vperm.xlu0 %282, %v261
      %v284 = vpop.permute.xlu0 %283
      %287 = vset.pattern.permute.xlu0 0
      %288 = vperm.xlu0 %287, %v262
      %v289 = vpop.permute.xlu0 %288
      %292 = vset.pattern.permute.xlu0 0
      %293 = vperm.xlu0 %292, %v263
      %v294 = vpop.permute.xlu0 %293
      %297 = vset.pattern.permute.xlu0 0
      %298 = vperm.xlu0 %297, %v264
      %v299 = vpop.permute.xlu0 %298
      %302 = vset.pattern.permute.xlu0 0
      %303 = vperm.xlu0 %302, %v265
      %v304 = vpop.permute.xlu0 %303
      %v306 = vmul.f32 %v226, %v269
      %v307 = vmul.f32 %v227, %v269
      %v308 = vmul.f32 %v228, %v269
      %v309 = vmul.f32 %v229, %v269
      %v310 = vmul.f32 %v230, %v274
      %v311 = vmul.f32 %v231, %v274
      %v312 = vmul.f32 %v232, %v274
      %v313 = vmul.f32 %v233, %v274
      %v314 = vmul.f32 %v234, %v279
      %v315 = vmul.f32 %v235, %v279
      %v316 = vmul.f32 %v236, %v279
      %v317 = vmul.f32 %v237, %v279
      %v318 = vmul.f32 %v238, %v284
      %v319 = vmul.f32 %v239, %v284
      %v320 = vmul.f32 %v240, %v284
      %v321 = vmul.f32 %v241, %v284
      %v322 = vmul.f32 %v242, %v289
      %v323 = vmul.f32 %v243, %v289
      %v324 = vmul.f32 %v244, %v289
      %v325 = vmul.f32 %v245, %v289
      %v326 = vmul.f32 %v246, %v294
      %v327 = vmul.f32 %v247, %v294
      %v328 = vmul.f32 %v248, %v294
      %v329 = vmul.f32 %v249, %v294
      %v330 = vmul.f32 %v250, %v299
      %v331 = vmul.f32 %v251, %v299
      %v332 = vmul.f32 %v252, %v299
      %v333 = vmul.f32 %v253, %v299
      %v334 = vmul.f32 %v254, %v304
      %v335 = vmul.f32 %v255, %v304
      %v336 = vmul.f32 %v256, %v304
      %v337 = vmul.f32 %v257, %v304
      %v338 = vld [vmem:[%s2] sm:$0xff]
      %v339 = vld [vmem:[%s2 + $0x8] sm:$0xff]
      %v340 = vld [vmem:[%s2 + $0x10] sm:$0xff]
      %v341 = vld [vmem:[%s2 + $0x18] sm:$0xff]
      %v342 = vld [vmem:[%s2 + $0x20] sm:$0xff]
      %v343 = vld [vmem:[%s2 + $0x28] sm:$0xff]
      %v344 = vld [vmem:[%s2 + $0x30] sm:$0xff]
      %v345 = vld [vmem:[%s2 + $0x38] sm:$0xff]
      %347 = vset.pattern.permute.xlu0 0
      %348 = vperm.xlu0 %347, %v338
      %v349 = vpop.permute.xlu0 %348
      %352 = vset.pattern.permute.xlu0 0
      %353 = vperm.xlu0 %352, %v339
      %v354 = vpop.permute.xlu0 %353
      %357 = vset.pattern.permute.xlu0 0
      %358 = vperm.xlu0 %357, %v340
      %v359 = vpop.permute.xlu0 %358
      %362 = vset.pattern.permute.xlu0 0
      %363 = vperm.xlu0 %362, %v341
      %v364 = vpop.permute.xlu0 %363
      %367 = vset.pattern.permute.xlu0 0
      %368 = vperm.xlu0 %367, %v342
      %v369 = vpop.permute.xlu0 %368
      %372 = vset.pattern.permute.xlu0 0
      %373 = vperm.xlu0 %372, %v343
      %v374 = vpop.permute.xlu0 %373
      %377 = vset.pattern.permute.xlu0 0
      %378 = vperm.xlu0 %377, %v344
      %v379 = vpop.permute.xlu0 %378
      %382 = vset.pattern.permute.xlu0 0
      %383 = vperm.xlu0 %382, %v345
      %v384 = vpop.permute.xlu0 %383
      %v386 = vadd.f32 %v306, %v349
      %v387 = vadd.f32 %v307, %v349
      %v388 = vadd.f32 %v308, %v349
      %v389 = vadd.f32 %v309, %v349
      %v390 = vadd.f32 %v310, %v354
      %v391 = vadd.f32 %v311, %v354
      %v392 = vadd.f32 %v312, %v354
      %v393 = vadd.f32 %v313, %v354
      %v394 = vadd.f32 %v314, %v359
      %v395 = vadd.f32 %v315, %v359
      %v396 = vadd.f32 %v316, %v359
      %v397 = vadd.f32 %v317, %v359
      %v398 = vadd.f32 %v318, %v364
      %v399 = vadd.f32 %v319, %v364
      %v400 = vadd.f32 %v320, %v364
      %v401 = vadd.f32 %v321, %v364
      %v402 = vadd.f32 %v322, %v369
      %v403 = vadd.f32 %v323, %v369
      %v404 = vadd.f32 %v324, %v369
      %v405 = vadd.f32 %v325, %v369
      %v406 = vadd.f32 %v326, %v374
      %v407 = vadd.f32 %v327, %v374
      %v408 = vadd.f32 %v328, %v374
      %v409 = vadd.f32 %v329, %v374
      %v410 = vadd.f32 %v330, %v379
      %v411 = vadd.f32 %v331, %v379
      %v412 = vadd.f32 %v332, %v379
      %v413 = vadd.f32 %v333, %v379
      %v414 = vadd.f32 %v334, %v384
      %v415 = vadd.f32 %v335, %v384
      %v416 = vadd.f32 %v336, %v384
      %v417 = vadd.f32 %v337, %v384
      %v418 = vmax.f32 %v386, 0.0
      %v419 = vmax.f32 %v387, 0.0
      %v420 = vmax.f32 %v388, 0.0
      %v421 = vmax.f32 %v389, 0.0
      %v422 = vmax.f32 %v390, 0.0
      %v423 = vmax.f32 %v391, 0.0
      %v424 = vmax.f32 %v392, 0.0
      %v425 = vmax.f32 %v393, 0.0
      %v426 = vmax.f32 %v394, 0.0
      %v427 = vmax.f32 %v395, 0.0
      %v428 = vmax.f32 %v396, 0.0
      %v429 = vmax.f32 %v397, 0.0
      %v430 = vmax.f32 %v398, 0.0
      %v431 = vmax.f32 %v399, 0.0
      %v432 = vmax.f32 %v400, 0.0
      %v433 = vmax.f32 %v401, 0.0
      %v434 = vmax.f32 %v402, 0.0
      %v435 = vmax.f32 %v403, 0.0
      %v436 = vmax.f32 %v404, 0.0
      %v437 = vmax.f32 %v405, 0.0
      %v438 = vmax.f32 %v406, 0.0
      %v439 = vmax.f32 %v407, 0.0
      %v440 = vmax.f32 %v408, 0.0
      %v441 = vmax.f32 %v409, 0.0
      %v442 = vmax.f32 %v410, 0.0
      %v443 = vmax.f32 %v411, 0.0
      %v444 = vmax.f32 %v412, 0.0
      %v445 = vmax.f32 %v413, 0.0
      %v446 = vmax.f32 %v414, 0.0
      %v447 = vmax.f32 %v415, 0.0
      %v448 = vmax.f32 %v416, 0.0
      %v449 = vmax.f32 %v417, 0.0
      %450 = vst [vmem:[%s208] sm:$0xff] %v418
      %451 = vst [vmem:[%s208 + $0x8] sm:$0xff] %v419
      %452 = vst [vmem:[%s208 + $0x10] sm:$0xff] %v420
      %453 = vst [vmem:[%s208 + $0x18] sm:$0xff] %v421
      %454 = vst [vmem:[%s208 + $0x20] sm:$0xff] %v422
      %455 = vst [vmem:[%s208 + $0x28] sm:$0xff] %v423
      %456 = vst [vmem:[%s208 + $0x30] sm:$0xff] %v424
      %457 = vst [vmem:[%s208 + $0x38] sm:$0xff] %v425
      %458 = vst [vmem:[%s208 + $0x40] sm:$0xff] %v426
      %459 = vst [vmem:[%s208 + $0x48] sm:$0xff] %v427
      %460 = vst [vmem:[%s208 + $0x50] sm:$0xff] %v428
      %461 = vst [vmem:[%s208 + $0x58] sm:$0xff] %v429
      %462 = vst [vmem:[%s208 + $0x60] sm:$0xff] %v430
      %463 = vst [vmem:[%s208 + $0x68] sm:$0xff] %v431
      %464 = vst [vmem:[%s208 + $0x70] sm:$0xff] %v432
      %465 = vst [vmem:[%s208 + $0x78] sm:$0xff] %v433
      %466 = vst [vmem:[%s208 + $0x80] sm:$0xff] %v434
      %467 = vst [vmem:[%s208 + $0x88] sm:$0xff] %v435
      %468 = vst [vmem:[%s208 + $0x90] sm:$0xff] %v436
      %469 = vst [vmem:[%s208 + $0x98] sm:$0xff] %v437
      %470 = vst [vmem:[%s208 + $0xa0] sm:$0xff] %v438
      %471 = vst [vmem:[%s208 + $0xa8] sm:$0xff] %v439
      %472 = vst [vmem:[%s208 + $0xb0] sm:$0xff] %v440
      %473 = vst [vmem:[%s208 + $0xb8] sm:$0xff] %v441
      %474 = vst [vmem:[%s208 + $0xc0] sm:$0xff] %v442
      %475 = vst [vmem:[%s208 + $0xc8] sm:$0xff] %v443
      %476 = vst [vmem:[%s208 + $0xd0] sm:$0xff] %v444
      %477 = vst [vmem:[%s208 + $0xd8] sm:$0xff] %v445
      %478 = vst [vmem:[%s208 + $0xe0] sm:$0xff] %v446
      %479 = vst [vmem:[%s208 + $0xe8] sm:$0xff] %v447
      %480 = vst [vmem:[%s208 + $0xf0] sm:$0xff] %v448
      %481 = vst [vmem:[%s208 + $0xf8] sm:$0xff] %v449
      %s482 = smul.u32 4, %s19
      %p483 = scmp.lt.s32.totalorder %s18, 1
      %s484 = scalar_select %p483, %s18, 1
      %p485 = scmp.lt.s32.totalorder %s482, 3
      %s486 = scalar_select %p485, %s482, 3
      %s487 = smul.addr %s484, 32
      %s488 = sadd.s32 %s486, %s487
      %s489 = smul.addr %s488, 8
      %s490 = scalar_lea.vmem %s3, %s489
      // Predicated region
      $region33: #{upsample3d_unit.3} parent=31 // pred_check
        %p491 = pneg %p116
      $region34: #{upsample3d_unit.3} parent=31 // pred_check_branch
        %493 = sbr.rel (%p491) target = $region36
      $region35: #{upsample3d_unit.3} parent=31 // pred_region
        %s494 = smul.u32 4, %s19
      $region36: #{upsample3d_unit.3} parent=31 // pred_fallthru
        _
    $region32: #{upsample3d_unit.3} parent=5 // pred_fallthru
      _
    %p495 = scmp.le.s32.totalorder 2, %s9
    // Predicated region
    $region37: #{upsample3d_unit.3} parent=5 // pred_check
      %p496 = pneg %p495
    $region38: #{upsample3d_unit.3} parent=5 // pred_check_branch
      %498 = sbr.rel (%p496) target = $region40
    $region39: #{upsample3d_unit.3} parent=5 // pred_region
      %s499 = ssub.s32 %s9, 2
      // Predicated region
      $region41: #{upsample3d_unit.3} parent=39 // pred_check
        %p500 = pneg %p122
      $region42: #{upsample3d_unit.3} parent=39 // pred_check_branch
        %502 = sbr.rel (%p500) target = $region44
      $region43: #{upsample3d_unit.3} parent=39 // pred_region
        %s503 = smul.u32 4, %s21
        %p504 = scmp.lt.s32.totalorder %s20, 1
        %s505 = scalar_select %p504, %s20, 1
        %p506 = scmp.lt.s32.totalorder %s503, 3
        %s507 = scalar_select %p506, %s503, 3
        %s508 = smul.addr %s505, 32
        %s509 = sadd.s32 %s507, %s508
        %s510 = smul.addr %s509, 8
        %s511 = scalar_lea.vmem %s3, %s510
      $region44: #{upsample3d_unit.3} parent=39 // pred_fallthru
        _
    $region40: #{upsample3d_unit.3} parent=5 // pred_fallthru
      _
  $region6: #{upsample3d_unit.3} parent=0 // loop_footer
    %s13 = sadd.s32 1, %s9
  $region7: #{upsample3d_unit.3} parent=0 // loop_footer_branch
    %8 = sbr.rel target = $region3
  $region8: #{upsample3d_unit.3} parent=0 // loop_exit
    _

// kernel: upsample3d_unit.2
$region0: #{upsample3d_unit.2}
  #allocation0 [shape = 'u32[]', space=smem, size = 0x4, offset = 0x4, fixed_abs, tag = 'smem constant byte address 0x4 - core index']
  #allocation1 [shape = 'u32[144,128]{1,0:T(1,128)}', space=vmem, size = 0x12000, scoped, tag = 'internal scratch']
  %s0 = inlined_call_operand.vmem [shape: bf16[64,32], index: 0, kind: input, shape index: {}]
  %s1 = inlined_call_operand.vmem [shape: bf16[2,32,512], index: 1, kind: input, shape index: {}]
  %s2 = inlined_call_operand.vmem [shape: bf16[2,64,512], index: 2, kind: output, shape index: {0}]
  %s3 = inlined_call_operand.vmem [shape: f32[2,64,1], index: 3, kind: output, shape index: {1}]
  %s4 = inlined_call_operand.vmem [shape: f32[2,64,1], index: 4, kind: output, shape index: {2}]
  %5 = xla_tuple %s2, %s3, %s4
  %s6 = sld [smem:[#allocation0]]
  $region61: #{upsample3d_unit.2} parent=0
    _
  %s8 = ssub.s32 1, %s6
  %s9 = scalar_select 0, %s8, %s6
  loop: start=0, step=1, limit=4
  $region2: #{upsample3d_unit.2} parent=0 // loop_pre_header
    _
  $region3: #{upsample3d_unit.2} parent=0 // loop_header
    %s11 = sphi 0, %s15
    %p12 = scmp.ge.s32.totalorder %s11, 4
    %s18 = sphi 0, %s30
    %s19 = sphi 0, %s26
    %s20 = sphi 0, %s18
    %s21 = sphi 0, %s19
    %s22 = sphi 0, %s20
    %s23 = sphi 0, %s21
    %s31 = sphi 0, %s31
    %s33 = sphi 0, %s31
    %s34 = sphi 0, %s33
    %s48 = sphi 0, %s34
    %s56 = sphi 0, %s58
    %s59 = sphi 0, %s56
    %s60 = sphi 0, %s59
    %s76 = sphi 0, %s60
    %s84 = sphi 0, %s86
    %s87 = sphi 0, %s84
    %s88 = sphi 0, %s87
    %s104 = sphi 0, %s88
    %s110 = sphi 0, %s112
    %s113 = sphi 0, %s110
    %s114 = sphi 0, %s113
    %s130 = sphi 0, %s114
    %s136 = sphi 0, %s138
    %s139 = sphi 0, %s136
    %s140 = sphi 0, %s139
    %s156 = sphi 0, %s140
  $region4: #{upsample3d_unit.2} parent=0 // loop_header_branch
    %14 = sbr.rel (%p12) target = $region8
  $region5: #{upsample3d_unit.2} parent=0 // loop_body
    %s16 = ssub.s32 %s11, 1
    %s17 = ssub.s32 %s11, 2
    %s24 = sadd.s32 1, %s19
    %p25 = scmp.ge.s32.totalorder %s24, 1
    %s26 = scalar_select %p25, 0, %s24
    %s27 = sadd.s32 1, %s18
    %s28 = scalar_select %p25, %s27, %s18
    %p29 = scmp.ge.s32.totalorder %s28, 2
    %s30 = scalar_select %p29, 0, %s28
    %s32 = sadd.s32 %s31, 1
    %p35 = scmp.eq.s32.totalorder %s11, 1
    %p36 = scmp.ne.s32.totalorder %s31, %s33
    %p37 = scmp.eq.s32.totalorder %s11, 0
    %p38 = por %p36, %p37
    %p39 = scmp.ne.s32.totalorder %s31, %s33
    %p40 = scmp.eq.s32.totalorder %s16, 1
    %p41 = por %p39, %p40
    %p42 = scmp.ne.s32.totalorder %s33, %s34
    %p43 = scmp.eq.s32.totalorder %s16, 0
    %p44 = por %p42, %p43
    %p45 = scmp.ne.s32.totalorder %s33, %s34
    %p46 = scmp.eq.s32.totalorder %s17, 1
    %p47 = por %p45, %p46
    %p49 = scmp.ne.s32.totalorder %s34, %s48
    %p50 = scmp.eq.s32.totalorder %s17, 0
    %p51 = por %p49, %p50
    %s52 = ssub.s32 %s18, %s30
    %s53 = ssub.s32 %s19, %s26
    %s54 = sor.u32 %s52, %s53
    %p55 = scmp.eq.s32.totalorder %s54, 0
    %s57 = sadd.s32 %s56, 1
    %s58 = scalar_select %p55, %s56, %s57
    %p61 = pneg %p55
    %p62 = scmp.eq.s32.totalorder %s11, 1
    %p63 = por %p61, %p62
    %p64 = scmp.ne.s32.totalorder %s56, %s59
    %p65 = scmp.eq.s32.totalorder %s11, 0
    %p66 = por %p64, %p65
    %p67 = scmp.ne.s32.totalorder %s56, %s59
    %p68 = scmp.eq.s32.totalorder %s16, 1
    %p69 = por %p67, %p68
    %p70 = scmp.ne.s32.totalorder %s59, %s60
    %p71 = scmp.eq.s32.totalorder %s16, 0
    %p72 = por %p70, %p71
    %p73 = scmp.ne.s32.totalorder %s59, %s60
    %p74 = scmp.eq.s32.totalorder %s17, 1
    %p75 = por %p73, %p74
    %p77 = scmp.ne.s32.totalorder %s60, %s76
    %p78 = scmp.eq.s32.totalorder %s17, 0
    %p79 = por %p77, %p78
    %s80 = ssub.s32 %s18, %s30
    %s81 = ssub.s32 %s19, %s26
    %s82 = sor.u32 %s80, %s81
    %p83 = scmp.eq.s32.totalorder %s82, 0
    %s85 = sadd.s32 %s84, 1
    %s86 = scalar_select %p83, %s84, %s85
    %p89 = pneg %p83
    %p90 = scmp.eq.s32.totalorder %s11, 1
    %p91 = por %p89, %p90
    %p92 = scmp.ne.s32.totalorder %s84, %s87
    %p93 = scmp.eq.s32.totalorder %s11, 0
    %p94 = por %p92, %p93
    %p95 = scmp.ne.s32.totalorder %s84, %s87
    %p96 = scmp.eq.s32.totalorder %s16, 1
    %p97 = por %p95, %p96
    %p98 = scmp.ne.s32.totalorder %s87, %s88
    %p99 = scmp.eq.s32.totalorder %s16, 0
    %p100 = por %p98, %p99
    %p101 = scmp.ne.s32.totalorder %s87, %s88
    %p102 = scmp.eq.s32.totalorder %s17, 1
    %p103 = por %p101, %p102
    %p105 = scmp.ne.s32.totalorder %s88, %s104
    %p106 = scmp.eq.s32.totalorder %s17, 0
    %p107 = por %p105, %p106
    %s108 = ssub.s32 %s18, %s30
    %p109 = scmp.eq.s32.totalorder %s108, 0
    %s111 = sadd.s32 %s110, 1
    %s112 = scalar_select %p109, %s110, %s111
    %p115 = pneg %p109
    %p116 = scmp.eq.s32.totalorder %s11, 1
    %p117 = por %p115, %p116
    %p118 = scmp.ne.s32.totalorder %s110, %s113
    %p119 = scmp.eq.s32.totalorder %s11, 0
    %p120 = por %p118, %p119
    %p121 = scmp.ne.s32.totalorder %s110, %s113
    %p122 = scmp.eq.s32.totalorder %s16, 1
    %p123 = por %p121, %p122
    %p124 = scmp.ne.s32.totalorder %s113, %s114
    %p125 = scmp.eq.s32.totalorder %s16, 0
    %p126 = por %p124, %p125
    %p127 = scmp.ne.s32.totalorder %s113, %s114
    %p128 = scmp.eq.s32.totalorder %s17, 1
    %p129 = por %p127, %p128
    %p131 = scmp.ne.s32.totalorder %s114, %s130
    %p132 = scmp.eq.s32.totalorder %s17, 0
    %p133 = por %p131, %p132
    %s134 = ssub.s32 %s18, %s30
    %p135 = scmp.eq.s32.totalorder %s134, 0
    %s137 = sadd.s32 %s136, 1
    %s138 = scalar_select %p135, %s136, %s137
    %p141 = pneg %p135
    %p142 = scmp.eq.s32.totalorder %s11, 1
    %p143 = por %p141, %p142
    %p144 = scmp.ne.s32.totalorder %s136, %s139
    %p145 = scmp.eq.s32.totalorder %s11, 0
    %p146 = por %p144, %p145
    %p147 = scmp.ne.s32.totalorder %s136, %s139
    %p148 = scmp.eq.s32.totalorder %s16, 1
    %p149 = por %p147, %p148
    %p150 = scmp.ne.s32.totalorder %s139, %s140
    %p151 = scmp.eq.s32.totalorder %s16, 0
    %p152 = por %p150, %p151
    %p153 = scmp.ne.s32.totalorder %s139, %s140
    %p154 = scmp.eq.s32.totalorder %s17, 1
    %p155 = por %p153, %p154
    %p157 = scmp.ne.s32.totalorder %s140, %s156
    %p158 = scmp.eq.s32.totalorder %s17, 0
    %p159 = por %p157, %p158
    %p160 = scmp.le.s32.totalorder 1, %s11
    %p161 = scmp.lt.s32.totalorder %s11, 3
    %p162 = pnand %p160, %p161
    %p163 = pneg %p162
    // Predicated region
    $region9: #{upsample3d_unit.2} parent=5 // pred_check
      _
    $region10: #{upsample3d_unit.2} parent=5 // pred_check_branch
      %165 = sbr.rel (%p162) target = $region12
    $region11: #{upsample3d_unit.2} parent=5 // pred_region
      %s166 = ssub.s32 %s11, 1
      // Predicated region
      $region13: #{upsample3d_unit.2} parent=11 // pred_check
        %p167 = pneg %p44
      $region14: #{upsample3d_unit.2} parent=11 // pred_check_branch
        %169 = sbr.rel (%p167) target = $region16
      $region15: #{upsample3d_unit.2} parent=11 // pred_region
        _
      $region16: #{upsample3d_unit.2} parent=11 // pred_fallthru
        _
    $region12: #{upsample3d_unit.2} parent=5 // pred_fallthru
      _
    %p170 = scmp.lt.s32.totalorder %s11, 2
    // Predicated region
    $region17: #{upsample3d_unit.2} parent=5 // pred_check
      %p171 = pneg %p170
    $region18: #{upsample3d_unit.2} parent=5 // pred_check_branch
      %173 = sbr.rel (%p171) target = $region20
    $region19: #{upsample3d_unit.2} parent=5 // pred_region
      // Predicated region
      $region21: #{upsample3d_unit.2} parent=19 // pred_check
        %p174 = pneg %p66
      $region22: #{upsample3d_unit.2} parent=19 // pred_check_branch
        %176 = sbr.rel (%p174) target = $region24
      $region23: #{upsample3d_unit.2} parent=19 // pred_region
        %s177 = smul.u32 4, %s19
        %p178 = scmp.lt.s32.totalorder %s18, 1
        %s179 = scalar_select %p178, %s18, 1
        %p180 = scmp.lt.s32.totalorder %s177, 3
        %s181 = scalar_select %p180, %s177, 3
        %s182 = smul.addr %s179, 16
        %s183 = sadd.s32 %s181, %s182
        %s184 = smul.addr %s183, 4
        %s185 = scalar_lea.vmem %s1, %s184
        %s186 = smul.u32 4, %s19
      $region24: #{upsample3d_unit.2} parent=19 // pred_fallthru
        _
    $region20: #{upsample3d_unit.2} parent=5 // pred_fallthru
      _
    %p187 = scmp.le.s32.totalorder 1, %s11
    %p188 = scmp.lt.s32.totalorder %s11, 3
    %p189 = pnand %p187, %p188
    %p190 = pneg %p189
    // Predicated region
    $region25: #{upsample3d_unit.2} parent=5 // pred_check
      _
    $region26: #{upsample3d_unit.2} parent=5 // pred_check_branch
      %192 = sbr.rel (%p189) target = $region28
    $region27: #{upsample3d_unit.2} parent=5 // pred_region
      %s193 = ssub.s32 %s11, 1
      %p194 = pneg %p44
      %p195 = pneg %p41
      %s196 = smul.u32 4, %s21
      %p197 = scmp.lt.s32.totalorder %s20, 1
      %s198 = scalar_select %p197, %s20, 1
      %p199 = scmp.lt.s32.totalorder %s196, 3
      %s200 = scalar_select %p199, %s196, 3
      %s201 = smul.addr %s198, 16
      %s202 = sadd.s32 %s200, %s201
      %s203 = smul.addr %s202, 4
      %s204 = scalar_lea.vmem %s1, %s203
      %p205 = pneg %p72
      %p206 = pneg %p69
      %p207 = pneg %p100
      %p208 = pneg %p97
      %s209 = smul.u32 4, %s21
      %p210 = scmp.lt.s32.totalorder %s20, 1
      %s211 = scalar_select %p210, %s20, 1
      %p212 = scmp.lt.s32.totalorder %s209, 3
      %s213 = scalar_select %p212, %s209, 3
      %s214 = smul.addr %s211, 32
      %s215 = sadd.s32 %s213, %s214
      %s216 = smul.addr %s215, 4
      %s217 = scalar_lea.vmem %s2, %s216
      %p218 = pneg %p126
      %p219 = pneg %p123
      %p220 = scmp.lt.s32.totalorder %s20, 1
      %s221 = scalar_select %p220, %s20, 1
      %s222 = smul.addr %s221, 8
      %s223 = smul.addr %s222, 8
      %s224 = scalar_lea.vmem %s3, %s223
      %p225 = pneg %p152
      %p226 = pneg %p149
      %p227 = scmp.lt.s32.totalorder %s20, 1
      %s228 = scalar_select %p227, %s20, 1
      %s229 = smul.addr %s228, 8
      %s230 = smul.addr %s229, 8
      %s231 = scalar_lea.vmem %s4, %s230
      %s232 = smul.u32 4, %s21
      %p233 = scmp.lt.s32.totalorder %s20, 1
      %s234 = scalar_select %p233, %s20, 1
      %p235 = scmp.lt.s32.totalorder %s232, 3
      %s236 = scalar_select %p235, %s232, 3
      %s237 = smul.addr %s234, 16
      %s238 = sadd.s32 %s236, %s237
      %s239 = smul.addr %s238, 4
      %s240 = scalar_lea.vmem %s1, %s239
      %s241 = smul.u32 4, %s21
      %s242 = smul.u32 4, %s21
      %p243 = scmp.lt.s32.totalorder %s20, 1
      %s244 = scalar_select %p243, %s20, 1
      %p245 = scmp.lt.s32.totalorder %s242, 3
      %s246 = scalar_select %p245, %s242, 3
      %s247 = smul.addr %s244, 32
      %s248 = sadd.s32 %s246, %s247
      %s249 = smul.addr %s248, 4
      %s250 = scalar_lea.vmem %s2, %s249
      %s251 = smul.u32 4, %s21
      %p252 = scmp.lt.s32.totalorder %s20, 1
      %s253 = scalar_select %p252, %s20, 1
      %s254 = smul.addr %s253, 8
      %s255 = smul.addr %s254, 8
      %s256 = scalar_lea.vmem %s3, %s255
      %p257 = scmp.lt.s32.totalorder %s20, 1
      %s258 = scalar_select %p257, %s20, 1
      %s259 = smul.addr %s258, 8
      %s260 = smul.addr %s259, 8
      %s261 = scalar_lea.vmem %s4, %s260
      %p263 = scmp.eq.s32.totalorder %s21, 0
      // Predicated region
      $region29: #{upsample3d_unit.2} parent=27 // pred_check
        %p264 = pneg %p263
      $region30: #{upsample3d_unit.2} parent=27 // pred_check_branch
        %266 = sbr.rel (%p264) target = $region32
      $region31: #{upsample3d_unit.2} parent=27 // pred_region
        %vm267 = vcmask 7168
        %268 = vst.msk [vmem:[%s256] sm:$0xff] %vm267, 0.0
        %269 = vst.msk [vmem:[%s256 + $0x8] sm:$0xff] %vm267, 0.0
        %270 = vst.msk [vmem:[%s256 + $0x10] sm:$0xff] %vm267, 0.0
        %271 = vst.msk [vmem:[%s256 + $0x18] sm:$0xff] %vm267, 0.0
        %272 = vst.msk [vmem:[%s256 + $0x20] sm:$0xff] %vm267, 0.0
        %273 = vst.msk [vmem:[%s256 + $0x28] sm:$0xff] %vm267, 0.0
        %274 = vst.msk [vmem:[%s256 + $0x30] sm:$0xff] %vm267, 0.0
        %275 = vst.msk [vmem:[%s256 + $0x38] sm:$0xff] %vm267, 0.0
        %276 = vst.msk [vmem:[%s261] sm:$0xff] %vm267, 0.0
        %277 = vst.msk [vmem:[%s261 + $0x8] sm:$0xff] %vm267, 0.0
        %278 = vst.msk [vmem:[%s261 + $0x10] sm:$0xff] %vm267, 0.0
        %279 = vst.msk [vmem:[%s261 + $0x18] sm:$0xff] %vm267, 0.0
        %280 = vst.msk [vmem:[%s261 + $0x20] sm:$0xff] %vm267, 0.0
        %281 = vst.msk [vmem:[%s261 + $0x28] sm:$0xff] %vm267, 0.0
        %282 = vst.msk [vmem:[%s261 + $0x30] sm:$0xff] %vm267, 0.0
        %283 = vst.msk [vmem:[%s261 + $0x38] sm:$0xff] %vm267, 0.0
      $region32: #{upsample3d_unit.2} parent=27 // pred_fallthru
        _
      %v284 = vld [vmem:[%s0] sm:$0xf]
      %v285 = vld [vmem:[%s0 + $0x4] sm:$0xf]
      %v286 = vld [vmem:[%s0 + $0x8] sm:$0xf]
      %v287 = vld [vmem:[%s0 + $0xc] sm:$0xf]
      %v288 = vld [vmem:[%s0 + $0x10] sm:$0xf]
      %v289 = vld [vmem:[%s0 + $0x14] sm:$0xf]
      %v290 = vld [vmem:[%s0 + $0x18] sm:$0xf]
      %v291 = vld [vmem:[%s0 + $0x1c] sm:$0xf]
      %v292 = vld [vmem:[%s240] sm:$0xff]
      %v293 = vld [vmem:[%s240 + $0x8] sm:$0xff]
      %v294 = vld [vmem:[%s240 + $0x10] sm:$0xff]
      %v295 = vld [vmem:[%s240 + $0x18] sm:$0xff]
      %v296 = vld [vmem:[%s240 + $0x20] sm:$0xff]
      %v297 = vld [vmem:[%s240 + $0x28] sm:$0xff]
      %v298 = vld [vmem:[%s240 + $0x30] sm:$0xff]
      %v299 = vld [vmem:[%s240 + $0x38] sm:$0xff]
      %v308 = vunpack.c.l.b16 %v284
      %v309 = vunpack.c.l.b16 %v285
      %v310 = vunpack.c.l.b16 %v286
      %v311 = vunpack.c.l.b16 %v287
      %v312 = vunpack.c.l.b16 %v288
      %v313 = vunpack.c.l.b16 %v289
      %v314 = vunpack.c.l.b16 %v290
      %v315 = vunpack.c.l.b16 %v291
      %v316 = vpack.c.b16 %v309, %v308
      %v317 = vpack.c.b16 %v311, %v310
      %v318 = vpack.c.b16 %v313, %v312
      %v319 = vpack.c.b16 %v315, %v314
      %v328 = vunpack.c.l.b16 %v292
      %v329 = vunpack.c.h.b16 %v292
      %v330 = vunpack.c.l.b16 %v293
      %v331 = vunpack.c.h.b16 %v293
      %v332 = vunpack.c.l.b16 %v294
      %v333 = vunpack.c.h.b16 %v294
      %v334 = vunpack.c.l.b16 %v295
      %v335 = vunpack.c.h.b16 %v295
      %v336 = vunpack.c.l.b16 %v296
      %v337 = vunpack.c.h.b16 %v296
      %v338 = vunpack.c.l.b16 %v297
      %v339 = vunpack.c.h.b16 %v297
      %v340 = vunpack.c.l.b16 %v298
      %v341 = vunpack.c.h.b16 %v298
      %v342 = vunpack.c.l.b16 %v299
      %v343 = vunpack.c.h.b16 %v299
      %v344 = vpack.c.b16 %v332, %v328
      %v345 = vpack.c.b16 %v333, %v329
      %v346 = vpack.c.b16 %v334, %v330
      %v347 = vpack.c.b16 %v335, %v331
      %v348 = vpack.c.b16 %v340, %v336
      %v349 = vpack.c.b16 %v341, %v337
      %v350 = vpack.c.b16 %v342, %v338
      %v351 = vpack.c.b16 %v343, %v339
      %vm360 = vcmask 261120
      %v362 = vsel %vm360, %v316, 0
      %v365 = vsel %vm360, %v317, 0
      %v368 = vsel %vm360, %v318, 0
      %v371 = vsel %vm360, %v319, 0
      %373 = vmatprep.subr.bf16.mxu0 %v345
      %374 = vmatpush1.bf16.msra.mxu0 %v344
      %375 = vmatprep.subr.bf16.mxu0 %v349
      %376 = vmatpush1.bf16.msra.mxu0 %v348
      %377 = vmatprep.subr.bf16.mxu0 0
      %378 = vmatpush1.bf16.msra.mxu0 0
      %379 = vmatprep.subr.bf16.mxu0 0
      %380 = vmatpush1.bf16.msra.mxu0 0
      %381 = vmatprep.subr.bf16.mxu0 0
      %382 = vmatpush1.bf16.msra.mxu0 0
      %383 = vmatprep.subr.bf16.mxu0 0
      %384 = vmatpush1.bf16.msra.mxu0 0
      %385 = vmatprep.subr.bf16.mxu0 0
      %386 = vmatpush1.bf16.msra.mxu0 0
      %387 = vmatprep.subr.bf16.mxu0 0
      %388 = vmatpush1.bf16.msra.mxu0 0
      %389 = vmatprep.subr.bf16.mxu0 0
      %390 = vmatpush1.bf16.msra.mxu0 0
      %391 = vmatprep.subr.bf16.mxu0 0
      %392 = vmatpush1.bf16.msra.mxu0 0
      %393 = vmatprep.subr.bf16.mxu0 0
      %394 = vmatpush1.bf16.msra.mxu0 0
      %395 = vmatprep.subr.bf16.mxu0 0
      %396 = vmatpush1.bf16.msra.mxu0 0
      %397 = vmatprep.subr.bf16.mxu0 0
      %398 = vmatpush1.bf16.msra.mxu0 0
      %399 = vmatprep.subr.bf16.mxu0 0
      %400 = vmatpush1.bf16.msra.mxu0 0
      %401 = vmatprep.subr.bf16.mxu0 0
      %402 = vmatpush1.bf16.msra.mxu0 0
      %403 = vmatprep.subr.bf16.mxu0 0
      %404 = vmatpush1.bf16.msra.mxu0 0
      %405 = vmatprep.mubr.bf16.mxu0 0
      %406 = vmatmul.mubr.bf16.gmra.mrb[0].mxu0 %v362
      %v407 = vpop.f32.mrb[0].mxu0
      %v408 = vadd.f32 0.0, %v407
      %v409 = vpop.f32.mrb[0].mxu0
      %v410 = vadd.f32 0.0, %v409
      %v411 = vpop.f32.mrb[0].mxu0
      %v412 = vadd.f32 0.0, %v411
      %v413 = vpop.f32.mrb[0].mxu0
      %v414 = vadd.f32 0.0, %v413
      %415 = vmatprep.mubr.bf16.mxu0 0
      %416 = vmatmul.mubr.bf16.gmra.mrb[0].mxu0 %v365
      %v417 = vpop.f32.mrb[0].mxu0
      %v418 = vadd.f32 0.0, %v417
      %v419 = vpop.f32.mrb[0].mxu0
      %v420 = vadd.f32 0.0, %v419
      %v421 = vpop.f32.mrb[0].mxu0
      %v422 = vadd.f32 0.0, %v421
      %v423 = vpop.f32.mrb[0].mxu0
      %v424 = vadd.f32 0.0, %v423
      %425 = vmatprep.mubr.bf16.mxu0 0
      %426 = vmatmul.mubr.bf16.gmra.mrb[0].mxu0 %v368
      %v427 = vpop.f32.mrb[0].mxu0
      %v428 = vadd.f32 0.0, %v427
      %v429 = vpop.f32.mrb[0].mxu0
      %v430 = vadd.f32 0.0, %v429
      %v431 = vpop.f32.mrb[0].mxu0
      %v432 = vadd.f32 0.0, %v431
      %v433 = vpop.f32.mrb[0].mxu0
      %v434 = vadd.f32 0.0, %v433
      %435 = vmatprep.mubr.bf16.mxu0 0
      %436 = vmatmul.mubr.bf16.gmra.mrb[0].mxu0 %v371
      %v437 = vpop.f32.mrb[0].mxu0
      %v438 = vadd.f32 0.0, %v437
      %v439 = vpop.f32.mrb[0].mxu0
      %v440 = vadd.f32 0.0, %v439
      %v441 = vpop.f32.mrb[0].mxu0
      %v442 = vadd.f32 0.0, %v441
      %v443 = vpop.f32.mrb[0].mxu0
      %v444 = vadd.f32 0.0, %v443
      %445 = vdwg.mxu0
      %446 = vmatprep.subr.bf16.mxu0 %v347
      %447 = vmatpush1.bf16.msra.mxu0 %v346
      %448 = vmatprep.subr.bf16.mxu0 %v351
      %449 = vmatpush1.bf16.msra.mxu0 %v350
      %450 = vmatprep.subr.bf16.mxu0 0
      %451 = vmatpush1.bf16.msra.mxu0 0
      %452 = vmatprep.subr.bf16.mxu0 0
      %453 = vmatpush1.bf16.msra.mxu0 0
      %454 = vmatprep.subr.bf16.mxu0 0
      %455 = vmatpush1.bf16.msra.mxu0 0
      %456 = vmatprep.subr.bf16.mxu0 0
      %457 = vmatpush1.bf16.msra.mxu0 0
      %458 = vmatprep.subr.bf16.mxu0 0
      %459 = vmatpush1.bf16.msra.mxu0 0
      %460 = vmatprep.subr.bf16.mxu0 0
      %461 = vmatpush1.bf16.msra.mxu0 0
      %462 = vmatprep.subr.bf16.mxu0 0
      %463 = vmatpush1.bf16.msra.mxu0 0
      %464 = vmatprep.subr.bf16.mxu0 0
      %465 = vmatpush1.bf16.msra.mxu0 0
      %466 = vmatprep.subr.bf16.mxu0 0
      %467 = vmatpush1.bf16.msra.mxu0 0
      %468 = vmatprep.subr.bf16.mxu0 0
      %469 = vmatpush1.bf16.msra.mxu0 0
      %470 = vmatprep.subr.bf16.mxu0 0
      %471 = vmatpush1.bf16.msra.mxu0 0
      %472 = vmatprep.subr.bf16.mxu0 0
      %473 = vmatpush1.bf16.msra.mxu0 0
      %474 = vmatprep.subr.bf16.mxu0 0
      %475 = vmatpush1.bf16.msra.mxu0 0
      %476 = vmatprep.subr.bf16.mxu0 0
      %477 = vmatpush1.bf16.msra.mxu0 0
      %478 = vmatprep.mubr.bf16.mxu0 0
      %479 = vmatmul.mubr.bf16.gmra.mrb[0].mxu0 %v362
      %v480 = vpop.f32.mrb[0].mxu0
      %v481 = vadd.f32 0.0, %v480
      %v482 = vpop.f32.mrb[0].mxu0
      %v483 = vadd.f32 0.0, %v482
      %v484 = vpop.f32.mrb[0].mxu0
      %v485 = vadd.f32 0.0, %v484
      %v486 = vpop.f32.mrb[0].mxu0
      %v487 = vadd.f32 0.0, %v486
      %488 = vmatprep.mubr.bf16.mxu0 0
      %489 = vmatmul.mubr.bf16.gmra.mrb[0].mxu0 %v365
      %v490 = vpop.f32.mrb[0].mxu0
      %v491 = vadd.f32 0.0, %v490
      %v492 = vpop.f32.mrb[0].mxu0
      %v493 = vadd.f32 0.0, %v492
      %v494 = vpop.f32.mrb[0].mxu0
      %v495 = vadd.f32 0.0, %v494
      %v496 = vpop.f32.mrb[0].mxu0
      %v497 = vadd.f32 0.0, %v496
      %498 = vmatprep.mubr.bf16.mxu0 0
      %499 = vmatmul.mubr.bf16.gmra.mrb[0].mxu0 %v368
      %v500 = vpop.f32.mrb[0].mxu0
      %v501 = vadd.f32 0.0, %v500
      %v502 = vpop.f32.mrb[0].mxu0
      %v503 = vadd.f32 0.0, %v502
      %v504 = vpop.f32.mrb[0].mxu0
      %v505 = vadd.f32 0.0, %v504
      %v506 = vpop.f32.mrb[0].mxu0
      %v507 = vadd.f32 0.0, %v506
      %508 = vmatprep.mubr.bf16.mxu0 0
      %509 = vmatmul.mubr.bf16.gmra.mrb[0].mxu0 %v371
      %v510 = vpop.f32.mrb[0].mxu0
      %v511 = vadd.f32 0.0, %v510
      %v512 = vpop.f32.mrb[0].mxu0
      %v513 = vadd.f32 0.0, %v512
      %v514 = vpop.f32.mrb[0].mxu0
      %v515 = vadd.f32 0.0, %v514
      %v516 = vpop.f32.mrb[0].mxu0
      %v517 = vadd.f32 0.0, %v516
      %518 = vdwg.mxu0
      %v519 = vpack.c.bf16 %v412, %v408
      %v520 = vpack.c.bf16 %v414, %v410
      %v521 = vpack.c.bf16 %v485, %v481
      %v522 = vpack.c.bf16 %v487, %v483
      %v523 = vpack.c.bf16 %v422, %v418
      %v524 = vpack.c.bf16 %v424, %v420
      %v525 = vpack.c.bf16 %v495, %v491
      %v526 = vpack.c.bf16 %v497, %v493
      %v527 = vpack.c.bf16 %v432, %v428
      %v528 = vpack.c.bf16 %v434, %v430
      %v529 = vpack.c.bf16 %v505, %v501
      %v530 = vpack.c.bf16 %v507, %v503
      %v531 = vpack.c.bf16 %v442, %v438
      %v532 = vpack.c.bf16 %v444, %v440
      %v533 = vpack.c.bf16 %v515, %v511
      %v534 = vpack.c.bf16 %v517, %v513
      %v551 = vunpack.c.l.b16 %v519
      %v552 = vunpack.c.l.b16 %v520
      %v553 = vunpack.c.l.b16 %v521
      %v554 = vunpack.c.l.b16 %v522
      %v555 = vunpack.c.h.b16 %v519
      %v556 = vunpack.c.h.b16 %v520
      %v557 = vunpack.c.h.b16 %v521
      %v558 = vunpack.c.h.b16 %v522
      %v559 = vunpack.c.l.b16 %v523
      %v560 = vunpack.c.l.b16 %v524
      %v561 = vunpack.c.l.b16 %v525
      %v562 = vunpack.c.l.b16 %v526
      %v563 = vunpack.c.h.b16 %v523
      %v564 = vunpack.c.h.b16 %v524
      %v565 = vunpack.c.h.b16 %v525
      %v566 = vunpack.c.h.b16 %v526
      %v567 = vunpack.c.l.b16 %v527
      %v568 = vunpack.c.l.b16 %v528
      %v569 = vunpack.c.l.b16 %v529
      %v570 = vunpack.c.l.b16 %v530
      %v571 = vunpack.c.h.b16 %v527
      %v572 = vunpack.c.h.b16 %v528
      %v573 = vunpack.c.h.b16 %v529
      %v574 = vunpack.c.h.b16 %v530
      %v575 = vunpack.c.l.b16 %v531
      %v576 = vunpack.c.l.b16 %v532
      %v577 = vunpack.c.l.b16 %v533
      %v578 = vunpack.c.l.b16 %v534
      %v579 = vunpack.c.h.b16 %v531
      %v580 = vunpack.c.h.b16 %v532
      %v581 = vunpack.c.h.b16 %v533
      %v582 = vunpack.c.h.b16 %v534
      %v583 = vpack.c.b16 %v552, %v551
      %v584 = vpack.c.b16 %v554, %v553
      %v585 = vpack.c.b16 %v556, %v555
      %v586 = vpack.c.b16 %v558, %v557
      %v587 = vpack.c.b16 %v560, %v559
      %v588 = vpack.c.b16 %v562, %v561
      %v589 = vpack.c.b16 %v564, %v563
      %v590 = vpack.c.b16 %v566, %v565
      %v591 = vpack.c.b16 %v568, %v567
      %v592 = vpack.c.b16 %v570, %v569
      %v593 = vpack.c.b16 %v572, %v571
      %v594 = vpack.c.b16 %v574, %v573
      %v595 = vpack.c.b16 %v576, %v575
      %v596 = vpack.c.b16 %v578, %v577
      %v597 = vpack.c.b16 %v580, %v579
      %v598 = vpack.c.b16 %v582, %v581
      %615 = vst [vmem:[%s250] sm:$0xff] %v583
      %616 = vst [vmem:[%s250 + $0x8] sm:$0xff] %v584
      %617 = vst [vmem:[%s250 + $0x10] sm:$0xff] %v585
      %618 = vst [vmem:[%s250 + $0x18] sm:$0xff] %v586
      %619 = vst [vmem:[%s250 + $0x20] sm:$0xff] %v587
      %620 = vst [vmem:[%s250 + $0x28] sm:$0xff] %v588
      %621 = vst [vmem:[%s250 + $0x30] sm:$0xff] %v589
      %622 = vst [vmem:[%s250 + $0x38] sm:$0xff] %v590
      %623 = vst [vmem:[%s250 + $0x40] sm:$0xff] %v591
      %624 = vst [vmem:[%s250 + $0x48] sm:$0xff] %v592
      %625 = vst [vmem:[%s250 + $0x50] sm:$0xff] %v593
      %626 = vst [vmem:[%s250 + $0x58] sm:$0xff] %v594
      %627 = vst [vmem:[%s250 + $0x60] sm:$0xff] %v595
      %628 = vst [vmem:[%s250 + $0x68] sm:$0xff] %v596
      %629 = vst [vmem:[%s250 + $0x70] sm:$0xff] %v597
      %630 = vst [vmem:[%s250 + $0x78] sm:$0xff] %v598
      %v631 = vld [vmem:[%s256] sm:$0xff]
      %v632 = vld [vmem:[%s256 + $0x8] sm:$0xff]
      %v633 = vld [vmem:[%s256 + $0x10] sm:$0xff]
      %v634 = vld [vmem:[%s256 + $0x18] sm:$0xff]
      %v635 = vld [vmem:[%s256 + $0x20] sm:$0xff]
      %v636 = vld [vmem:[%s256 + $0x28] sm:$0xff]
      %v637 = vld [vmem:[%s256 + $0x30] sm:$0xff]
      %v638 = vld [vmem:[%s256 + $0x38] sm:$0xff]
      %v639 = vadd.f32 %v408, %v410
      %v640 = vadd.f32 %v639, %v481
      %v641 = vadd.f32 %v640, %v483
      %642 = vadd.xlane.f32.xlu0 %v641
      %v643 = vpop.xlane.xlu0 %642
      %v644 = vadd.f32 %v412, %v414
      %v645 = vadd.f32 %v644, %v485
      %v646 = vadd.f32 %v645, %v487
      %647 = vadd.xlane.f32.xlu0 %v646
      %v648 = vpop.xlane.xlu0 %647
      %v649 = vadd.f32 %v418, %v420
      %v650 = vadd.f32 %v649, %v491
      %v651 = vadd.f32 %v650, %v493
      %652 = vadd.xlane.f32.xlu0 %v651
      %v653 = vpop.xlane.xlu0 %652
      %v654 = vadd.f32 %v422, %v424
      %v655 = vadd.f32 %v654, %v495
      %v656 = vadd.f32 %v655, %v497
      %657 = vadd.xlane.f32.xlu0 %v656
      %v658 = vpop.xlane.xlu0 %657
      %v659 = vadd.f32 %v428, %v430
      %v660 = vadd.f32 %v659, %v501
      %v661 = vadd.f32 %v660, %v503
      %662 = vadd.xlane.f32.xlu0 %v661
      %v663 = vpop.xlane.xlu0 %662
      %v664 = vadd.f32 %v432, %v434
      %v665 = vadd.f32 %v664, %v505
      %v666 = vadd.f32 %v665, %v507
      %667 = vadd.xlane.f32.xlu0 %v666
      %v668 = vpop.xlane.xlu0 %667
      %v669 = vadd.f32 %v438, %v440
      %v670 = vadd.f32 %v669, %v511
      %v671 = vadd.f32 %v670, %v513
      %672 = vadd.xlane.f32.xlu0 %v671
      %v673 = vpop.xlane.xlu0 %672
      %v674 = vadd.f32 %v442, %v444
      %v675 = vadd.f32 %v674, %v515
      %v676 = vadd.f32 %v675, %v517
      %677 = vadd.xlane.f32.xlu0 %v676
      %v678 = vpop.xlane.xlu0 %677
      %v679 = vadd.f32 %v631, %v643
      %v680 = vadd.f32 %v632, %v648
      %v681 = vadd.f32 %v633, %v653
      %v682 = vadd.f32 %v634, %v658
      %v683 = vadd.f32 %v635, %v663
      %v684 = vadd.f32 %v636, %v668
      %v685 = vadd.f32 %v637, %v673
      %v686 = vadd.f32 %v638, %v678
      %vm687 = vcmask 7168
      %688 = vst.msk [vmem:[%s256] sm:$0xff] %vm687, %v679
      %689 = vst.msk [vmem:[%s256 + $0x8] sm:$0xff] %vm687, %v680
      %690 = vst.msk [vmem:[%s256 + $0x10] sm:$0xff] %vm687, %v681
      %691 = vst.msk [vmem:[%s256 + $0x18] sm:$0xff] %vm687, %v682
      %692 = vst.msk [vmem:[%s256 + $0x20] sm:$0xff] %vm687, %v683
      %693 = vst.msk [vmem:[%s256 + $0x28] sm:$0xff] %vm687, %v684
      %694 = vst.msk [vmem:[%s256 + $0x30] sm:$0xff] %vm687, %v685
      %695 = vst.msk [vmem:[%s256 + $0x38] sm:$0xff] %vm687, %v686
      %v696 = vld [vmem:[%s261] sm:$0xff]
      %v697 = vld [vmem:[%s261 + $0x8] sm:$0xff]
      %v698 = vld [vmem:[%s261 + $0x10] sm:$0xff]
      %v699 = vld [vmem:[%s261 + $0x18] sm:$0xff]
      %v700 = vld [vmem:[%s261 + $0x20] sm:$0xff]
      %v701 = vld [vmem:[%s261 + $0x28] sm:$0xff]
      %v702 = vld [vmem:[%s261 + $0x30] sm:$0xff]
      %v703 = vld [vmem:[%s261 + $0x38] sm:$0xff]
      %v704 = vmul.f32 %v408, %v408
      %v705 = vmul.f32 %v410, %v410
      %v706 = vmul.f32 %v481, %v481
      %v707 = vmul.f32 %v483, %v483
      %v708 = vmul.f32 %v412, %v412
      %v709 = vmul.f32 %v414, %v414
      %v710 = vmul.f32 %v485, %v485
      %v711 = vmul.f32 %v487, %v487
      %v712 = vmul.f32 %v418, %v418
      %v713 = vmul.f32 %v420, %v420
      %v714 = vmul.f32 %v491, %v491
      %v715 = vmul.f32 %v493, %v493
      %v716 = vmul.f32 %v422, %v422
      %v717 = vmul.f32 %v424, %v424
      %v718 = vmul.f32 %v495, %v495
      %v719 = vmul.f32 %v497, %v497
      %v720 = vmul.f32 %v428, %v428
      %v721 = vmul.f32 %v430, %v430
      %v722 = vmul.f32 %v501, %v501
      %v723 = vmul.f32 %v503, %v503
      %v724 = vmul.f32 %v432, %v432
      %v725 = vmul.f32 %v434, %v434
      %v726 = vmul.f32 %v505, %v505
      %v727 = vmul.f32 %v507, %v507
      %v728 = vmul.f32 %v438, %v438
      %v729 = vmul.f32 %v440, %v440
      %v730 = vmul.f32 %v511, %v511
      %v731 = vmul.f32 %v513, %v513
      %v732 = vmul.f32 %v442, %v442
      %v733 = vmul.f32 %v444, %v444
      %v734 = vmul.f32 %v515, %v515
      %v735 = vmul.f32 %v517, %v517
      %v736 = vadd.f32 %v704, %v705
      %v737 = vadd.f32 %v736, %v706
      %v738 = vadd.f32 %v737, %v707
      %739 = vadd.xlane.f32.xlu0 %v738
      %v740 = vpop.xlane.xlu0 %739
      %v741 = vadd.f32 %v708, %v709
      %v742 = vadd.f32 %v741, %v710
      %v743 = vadd.f32 %v742, %v711
      %744 = vadd.xlane.f32.xlu0 %v743
      %v745 = vpop.xlane.xlu0 %744
      %v746 = vadd.f32 %v712, %v713
      %v747 = vadd.f32 %v746, %v714
      %v748 = vadd.f32 %v747, %v715
      %749 = vadd.xlane.f32.xlu0 %v748
      %v750 = vpop.xlane.xlu0 %749
      %v751 = vadd.f32 %v716, %v717
      %v752 = vadd.f32 %v751, %v718
      %v753 = vadd.f32 %v752, %v719
      %754 = vadd.xlane.f32.xlu0 %v753
      %v755 = vpop.xlane.xlu0 %754
      %v756 = vadd.f32 %v720, %v721
      %v757 = vadd.f32 %v756, %v722
      %v758 = vadd.f32 %v757, %v723
      %759 = vadd.xlane.f32.xlu0 %v758
      %v760 = vpop.xlane.xlu0 %759
      %v761 = vadd.f32 %v724, %v725
      %v762 = vadd.f32 %v761, %v726
      %v763 = vadd.f32 %v762, %v727
      %764 = vadd.xlane.f32.xlu0 %v763
      %v765 = vpop.xlane.xlu0 %764
      %v766 = vadd.f32 %v728, %v729
      %v767 = vadd.f32 %v766, %v730
      %v768 = vadd.f32 %v767, %v731
      %769 = vadd.xlane.f32.xlu0 %v768
      %v770 = vpop.xlane.xlu0 %769
      %v771 = vadd.f32 %v732, %v733
      %v772 = vadd.f32 %v771, %v734
      %v773 = vadd.f32 %v772, %v735
      %774 = vadd.xlane.f32.xlu0 %v773
      %v775 = vpop.xlane.xlu0 %774
      %v776 = vadd.f32 %v696, %v740
      %v777 = vadd.f32 %v697, %v745
      %v778 = vadd.f32 %v698, %v750
      %v779 = vadd.f32 %v699, %v755
      %v780 = vadd.f32 %v700, %v760
      %v781 = vadd.f32 %v701, %v765
      %v782 = vadd.f32 %v702, %v770
      %v783 = vadd.f32 %v703, %v775
      %784 = vst.msk [vmem:[%s261] sm:$0xff] %vm687, %v776
      %785 = vst.msk [vmem:[%s261 + $0x8] sm:$0xff] %vm687, %v777
      %786 = vst.msk [vmem:[%s261 + $0x10] sm:$0xff] %vm687, %v778
      %787 = vst.msk [vmem:[%s261 + $0x18] sm:$0xff] %vm687, %v779
      %788 = vst.msk [vmem:[%s261 + $0x20] sm:$0xff] %vm687, %v780
      %789 = vst.msk [vmem:[%s261 + $0x28] sm:$0xff] %vm687, %v781
      %790 = vst.msk [vmem:[%s261 + $0x30] sm:$0xff] %vm687, %v782
      %791 = vst.msk [vmem:[%s261 + $0x38] sm:$0xff] %vm687, %v783
      %s792 = smul.u32 4, %s21
      %p793 = scmp.lt.s32.totalorder %s20, 1
      %s794 = scalar_select %p793, %s20, 1
      %p795 = scmp.lt.s32.totalorder %s792, 3
      %s796 = scalar_select %p795, %s792, 3
      %s797 = smul.addr %s794, 32
      %s798 = sadd.s32 %s796, %s797
      %s799 = smul.addr %s798, 4
      %s800 = scalar_lea.vmem %s2, %s799
      %p801 = scmp.lt.s32.totalorder %s20, 1
      %s802 = scalar_select %p801, %s20, 1
      %s803 = smul.addr %s802, 8
      %s804 = smul.addr %s803, 8
      %s805 = scalar_lea.vmem %s3, %s804
      %p806 = scmp.lt.s32.totalorder %s20, 1
      %s807 = scalar_select %p806, %s20, 1
      %s808 = smul.addr %s807, 8
      %s809 = smul.addr %s808, 8
      %s810 = scalar_lea.vmem %s4, %s809
      // Predicated region
      $region33: #{upsample3d_unit.2} parent=27 // pred_check
        %p811 = pneg %p97
      $region34: #{upsample3d_unit.2} parent=27 // pred_check_branch
        %813 = sbr.rel (%p811) target = $region36
      $region35: #{upsample3d_unit.2} parent=27 // pred_region
        %s814 = smul.u32 4, %s21
      $region36: #{upsample3d_unit.2} parent=27 // pred_fallthru
        _
      // Predicated region
      $region37: #{upsample3d_unit.2} parent=27 // pred_check
        %p815 = pneg %p123
      $region38: #{upsample3d_unit.2} parent=27 // pred_check_branch
        %817 = sbr.rel (%p815) target = $region40
      $region39: #{upsample3d_unit.2} parent=27 // pred_region
        _
      $region40: #{upsample3d_unit.2} parent=27 // pred_fallthru
        _
      // Predicated region
      $region41: #{upsample3d_unit.2} parent=27 // pred_check
        %p818 = pneg %p149
      $region42: #{upsample3d_unit.2} parent=27 // pred_check_branch
        %820 = sbr.rel (%p818) target = $region44
      $region43: #{upsample3d_unit.2} parent=27 // pred_region
        _
      $region44: #{upsample3d_unit.2} parent=27 // pred_fallthru
        _
    $region28: #{upsample3d_unit.2} parent=5 // pred_fallthru
      _
    %p821 = scmp.le.s32.totalorder 2, %s11
    // Predicated region
    $region45: #{upsample3d_unit.2} parent=5 // pred_check
      %p822 = pneg %p821
    $region46: #{upsample3d_unit.2} parent=5 // pred_check_branch
      %824 = sbr.rel (%p822) target = $region48
    $region47: #{upsample3d_unit.2} parent=5 // pred_region
      %s825 = ssub.s32 %s11, 2
      // Predicated region
      $region49: #{upsample3d_unit.2} parent=47 // pred_check
        %p826 = pneg %p103
      $region50: #{upsample3d_unit.2} parent=47 // pred_check_branch
        %828 = sbr.rel (%p826) target = $region52
      $region51: #{upsample3d_unit.2} parent=47 // pred_region
        %s829 = smul.u32 4, %s23
        %p830 = scmp.lt.s32.totalorder %s22, 1
        %s831 = scalar_select %p830, %s22, 1
        %p832 = scmp.lt.s32.totalorder %s829, 3
        %s833 = scalar_select %p832, %s829, 3
        %s834 = smul.addr %s831, 32
        %s835 = sadd.s32 %s833, %s834
        %s836 = smul.addr %s835, 4
        %s837 = scalar_lea.vmem %s2, %s836
      $region52: #{upsample3d_unit.2} parent=47 // pred_fallthru
        _
      // Predicated region
      $region53: #{upsample3d_unit.2} parent=47 // pred_check
        %p838 = pneg %p129
      $region54: #{upsample3d_unit.2} parent=47 // pred_check_branch
        %840 = sbr.rel (%p838) target = $region56
      $region55: #{upsample3d_unit.2} parent=47 // pred_region
        %p841 = scmp.lt.s32.totalorder %s22, 1
        %s842 = scalar_select %p841, %s22, 1
        %s843 = smul.addr %s842, 8
        %s844 = smul.addr %s843, 8
        %s845 = scalar_lea.vmem %s3, %s844
      $region56: #{upsample3d_unit.2} parent=47 // pred_fallthru
        _
      // Predicated region
      $region57: #{upsample3d_unit.2} parent=47 // pred_check
        %p846 = pneg %p155
      $region58: #{upsample3d_unit.2} parent=47 // pred_check_branch
        %848 = sbr.rel (%p846) target = $region60
      $region59: #{upsample3d_unit.2} parent=47 // pred_region
        %p849 = scmp.lt.s32.totalorder %s22, 1
        %s850 = scalar_select %p849, %s22, 1
        %s851 = smul.addr %s850, 8
        %s852 = smul.addr %s851, 8
        %s853 = scalar_lea.vmem %s4, %s852
      $region60: #{upsample3d_unit.2} parent=47 // pred_fallthru
        _
    $region48: #{upsample3d_unit.2} parent=5 // pred_fallthru
      _
  $region6: #{upsample3d_unit.2} parent=0 // loop_footer
    %s15 = sadd.s32 1, %s11
  $region7: #{upsample3d_unit.2} parent=0 // loop_footer_branch
    %10 = sbr.rel target = $region3
  $region8: #{upsample3d_unit.2} parent=0 // loop_exit
    _

</llo_original>
